<compile_context>
chip_gen: v7x
topology: tpu7x:2x2x1
jax: 0.10.0
libtpu: 0.0.40
codegen_flags: <defaults>
</compile_context>

<pallas_src>
import jax
import jax.numpy as jnp
from jax.experimental import pallas as pl
from jax.experimental.pallas import tpu as pltpu

D_IN, D_H1, D_H2, D_OUT = 600, 1024, 256, 100
D_OUT_P = 128  # lane-aligned output width (100 -> 128); wrapper slices back


def _round_up(n, m):
    return ((n + m - 1) // m) * m


def mlp_kernel(x_ref, w1_ref, b1_ref, w2_ref, b2_ref, w3_ref, b3_ref, o_ref):
    # x arrives as f32 straight from HBM (no wrapper pad/cast pass); cast to
    # bf16 in VMEM for the MXU, accumulate in f32, f32 bias adds.
    x = x_ref[...].astype(jnp.bfloat16)
    # Layer 1: Linear(600 -> 1024) + ReLU
    h1 = jnp.dot(x, w1_ref[...], preferred_element_type=jnp.float32)
    h1 = jnp.maximum(h1 + b1_ref[...], 0.0).astype(jnp.bfloat16)
    # Layer 2: Linear(1024 -> 256) + ReLU
    h2 = jnp.dot(h1, w2_ref[...], preferred_element_type=jnp.float32)
    h2 = jnp.maximum(h2 + b2_ref[...], 0.0).astype(jnp.bfloat16)
    # Layer 3: Linear(256 -> 128 padded), no activation
    out = jnp.dot(h2, w3_ref[...], preferred_element_type=jnp.float32)
    o_ref[...] = (out + b3_ref[...]).astype(o_ref.dtype)


def _build_call(b_pad, tile_b, out_dtype):
    grid = (b_pad // tile_b,)
    flops = 2 * b_pad * (D_IN * D_H1 + D_H1 * D_H2 + D_H2 * D_OUT_P)
    w_bytes = 2 * (D_IN * D_H1 + D_H1 * D_H2 + D_H2 * D_OUT_P)  # bf16 weights
    bytes_accessed = (b_pad * D_IN * 4 + w_bytes
                      + b_pad * D_OUT_P * jnp.dtype(out_dtype).itemsize)
    return pl.pallas_call(
        mlp_kernel,
        out_shape=jax.ShapeDtypeStruct((b_pad, D_OUT_P), out_dtype),
        grid_spec=pltpu.PrefetchScalarGridSpec(
            num_scalar_prefetch=0,
            grid=grid,
            in_specs=[
                pl.BlockSpec((tile_b, D_IN), lambda i: (i, 0)),   # x (f32, batch-tiled)
                pl.BlockSpec((D_IN, D_H1), lambda i: (0, 0)),     # w1 (resident)
                pl.BlockSpec((1, D_H1), lambda i: (0, 0)),        # b1
                pl.BlockSpec((D_H1, D_H2), lambda i: (0, 0)),     # w2
                pl.BlockSpec((1, D_H2), lambda i: (0, 0)),        # b2
                pl.BlockSpec((D_H2, D_OUT_P), lambda i: (0, 0)),  # w3 (output-padded)
                pl.BlockSpec((1, D_OUT_P), lambda i: (0, 0)),     # b3 (output-padded)
            ],
            out_specs=pl.BlockSpec((tile_b, D_OUT_P), lambda i: (i, 0)),
        ),
        compiler_params=pltpu.CompilerParams(
            dimension_semantics=("parallel",),
        ),
        cost_estimate=pl.CostEstimate(
            flops=flops, transcendentals=0, bytes_accessed=bytes_accessed),
    )


def _pick_tile_b(B):
    """Batch-tile heuristic.

    Small batches: one grid step, rows rounded to 16 (bf16 sublane tile).
    Large batches: biggest tile (amortizes ~0.35us/step pipeline overhead)
    that still leaves >= 2 grid steps so the "parallel" axis keeps both v7x
    TensorCores busy; capped at 512 to stay well inside v5e's 16 MiB scoped
    VMEM default without any flags.
    """
    if B <= 256:
        return _round_up(max(B, 16), 16)
    for tb in (512, 256, 128):
        if B >= 2 * tb:
            return tb
    return 128


def cnn_forward(x, params, *, tile_b=None, out_dtype=jnp.float32):
    """x: (B, 600) float.  params: dict w1,b1,w2,b2,w3,b3 in (in, out) layout, f32."""
    B = x.shape[0]
    if tile_b is None:
        tile_b = _pick_tile_b(B)
    assert tile_b % 16 == 0, "tile_b must be a multiple of 16 (bf16 sublane tile)"
    b_pad = _round_up(B, tile_b)

    # Parameter cast/pad (cheap one-off XLA ops; pre-pad once in production).
    w1 = params["w1"].astype(jnp.bfloat16)
    w2 = params["w2"].astype(jnp.bfloat16)
    w3 = jnp.pad(params["w3"], ((0, 0), (0, D_OUT_P - D_OUT))).astype(jnp.bfloat16)
    b1 = params["b1"].astype(jnp.float32)
    b2 = params["b2"].astype(jnp.float32)
    b3 = jnp.pad(params["b3"], ((0, 0), (0, D_OUT_P - D_OUT))).astype(jnp.float32)

    # No feature padding / dtype pass over x; only pad batch rows if needed.
    xp = x.astype(jnp.float32)
    if b_pad != B:
        xp = jnp.pad(xp, ((0, b_pad - B), (0, 0)))

    out = _build_call(b_pad, tile_b, out_dtype)(xp, w1, b1, w2, b2, w3, b3)
    # Padded rows / columns 100..127 hold garbage by construction; always slice.
    return out[:B, :D_OUT]


def init_params(key):
    """Deterministic synthetic parameters (uniform, PyTorch-Linear-like scale)."""
    keys = jax.random.split(key, 6)

    def lin(kw, kb, d_in, d_out):
        bound = 1.0 / (d_in ** 0.5)
        w = jax.random.uniform(kw, (d_in, d_out), jnp.float32, -bound, bound)
        b = jax.random.uniform(kb, (1, d_out), jnp.float32, -bound, bound)
        return w, b

    w1, b1 = lin(keys[0], keys[1], D_IN, D_H1)
    w2, b2 = lin(keys[2], keys[3], D_H1, D_H2)
    w3, b3 = lin(keys[4], keys[5], D_H2, D_OUT)
    return {"w1": w1, "b1": b1, "w2": w2, "b2": b2, "w3": w3, "b3": b3}


def reference_forward(x, p):
    """Pure-JAX reference using the same bf16-input / f32-accumulate math."""
    def mm(a, w):
        return jnp.dot(a.astype(jnp.bfloat16), w.astype(jnp.bfloat16),
                       preferred_element_type=jnp.float32)

    h1 = jnp.maximum(mm(x, p["w1"]) + p["b1"], 0.0)
    h2 = jnp.maximum(mm(h1, p["w2"]) + p["b2"], 0.0)
    return mm(h2, p["w3"]) + p["b3"]


if __name__ == "__main__":
    key = jax.random.PRNGKey(0)
    k_x, k_x2, k_p = jax.random.split(key, 3)
    params = init_params(k_p)

    # Small demo batch (single grid step, rows rounded to 16).
    B = 4
    x = jax.random.normal(k_x, (B, D_IN), jnp.float32)
    out = jax.block_until_ready(cnn_forward(x, params))
    ref = reference_forward(x, params)
    assert out.shape == (B, D_OUT), out.shape
    assert jnp.allclose(out, ref, atol=2e-2, rtol=2e-2), "mismatch vs JAX reference (B=4)"

    # Multi-tile path: exercises batch padding, 3-step parallel grid, slicing.
    B2 = 300
    x2 = jax.random.normal(k_x2, (B2, D_IN), jnp.float32)
    out2 = jax.block_until_ready(cnn_forward(x2, params))
    ref2 = reference_forward(x2, params)
    assert out2.shape == (B2, D_OUT), out2.shape
    assert jnp.allclose(out2, ref2, atol=2e-2, rtol=2e-2), "mismatch vs JAX reference (B=300)"

    print("KERNEL_OK")
</pallas_src>

<mosaic_0001>
module attributes {stable_mosaic.version = 11 : i64} {
  func.func @mlp_kernel(%arg0: i32, %arg1: memref<16x600xf32, #tpu.memory_space<vmem>>, %arg2: memref<600x1024xbf16, #tpu.memory_space<vmem>>, %arg3: memref<1x1024xf32, #tpu.memory_space<vmem>>, %arg4: memref<1024x256xbf16, #tpu.memory_space<vmem>>, %arg5: memref<1x256xf32, #tpu.memory_space<vmem>>, %arg6: memref<256x128xbf16, #tpu.memory_space<vmem>>, %arg7: memref<1x128xf32, #tpu.memory_space<vmem>>, %arg8: memref<16x128xf32, #tpu.memory_space<vmem>>) attributes {dimension_semantics = [#tpu.dimension_semantics<parallel>], iteration_bounds = array<i64: 1>, scalar_prefetch = 0 : i64, scratch_operands = 0 : i64, tpu.core_type = #tpu.core_type<tc>, window_params = [{transform_indices = @transform_0, window_bounds = array<i64: 16, 600>}, {pipeline_mode = #tpu.pipeline_mode<synchronous>, transform_indices = @transform_1, window_bounds = array<i64: 600, 1024>}, {pipeline_mode = #tpu.pipeline_mode<synchronous>, transform_indices = @transform_2, window_bounds = array<i64: 1, 1024>}, {pipeline_mode = #tpu.pipeline_mode<synchronous>, transform_indices = @transform_3, window_bounds = array<i64: 1024, 256>}, {pipeline_mode = #tpu.pipeline_mode<synchronous>, transform_indices = @transform_4, window_bounds = array<i64: 1, 256>}, {pipeline_mode = #tpu.pipeline_mode<synchronous>, transform_indices = @transform_5, window_bounds = array<i64: 256, 128>}, {pipeline_mode = #tpu.pipeline_mode<synchronous>, transform_indices = @transform_6, window_bounds = array<i64: 1, 128>}, {transform_indices = @transform_7, window_bounds = array<i64: 16, 128>}]} {
    %c0 = arith.constant 0 : index
    %c0_0 = arith.constant 0 : index
    %0 = vector.load %arg1[%c0, %c0_0] : memref<16x600xf32, #tpu.memory_space<vmem>>, vector<16x600xf32>
    %1 = arith.truncf %0 : vector<16x600xf32> to vector<16x600xbf16>
    %c0_1 = arith.constant 0 : index
    %c0_2 = arith.constant 0 : index
    %2 = vector.load %arg2[%c0_1, %c0_2] : memref<600x1024xbf16, #tpu.memory_space<vmem>>, vector<600x1024xbf16>
    %cst = arith.constant dense<0.000000e+00> : vector<16x1024xf32>
    %3 = tpu.matmul %1, %2, %cst {dimension_numbers = #tpu.dot_dimension_numbers<[1], [0], [0], [1], [0, 0, 1, 1], [], []>} : vector<16x600xbf16>, vector<600x1024xbf16>, vector<16x1024xf32> -> vector<16x1024xf32>
    %c0_3 = arith.constant 0 : index
    %c0_4 = arith.constant 0 : index
    %4 = vector.load %arg3[%c0_3, %c0_4] : memref<1x1024xf32, #tpu.memory_space<vmem>>, vector<1x1024xf32>
    %5 = vector.broadcast %4 : vector<1x1024xf32> to vector<16x1024xf32>
    %6 = arith.addf %3, %5 : vector<16x1024xf32>
    %cst_5 = arith.constant 0.000000e+00 : f32
    %7 = vector.broadcast %cst_5 : f32 to vector<16x1024xf32>
    %8 = arith.maximumf %6, %7 : vector<16x1024xf32>
    %9 = arith.truncf %8 : vector<16x1024xf32> to vector<16x1024xbf16>
    %c0_6 = arith.constant 0 : index
    %c0_7 = arith.constant 0 : index
    %10 = vector.load %arg4[%c0_6, %c0_7] : memref<1024x256xbf16, #tpu.memory_space<vmem>>, vector<1024x256xbf16>
    %cst_8 = arith.constant dense<0.000000e+00> : vector<16x256xf32>
    %11 = tpu.matmul %9, %10, %cst_8 {dimension_numbers = #tpu.dot_dimension_numbers<[1], [0], [0], [1], [0, 0, 1, 1], [], []>} : vector<16x1024xbf16>, vector<1024x256xbf16>, vector<16x256xf32> -> vector<16x256xf32>
    %c0_9 = arith.constant 0 : index
    %c0_10 = arith.constant 0 : index
    %12 = vector.load %arg5[%c0_9, %c0_10] : memref<1x256xf32, #tpu.memory_space<vmem>>, vector<1x256xf32>
    %13 = vector.broadcast %12 : vector<1x256xf32> to vector<16x256xf32>
    %14 = arith.addf %11, %13 : vector<16x256xf32>
    %cst_11 = arith.constant 0.000000e+00 : f32
    %15 = vector.broadcast %cst_11 : f32 to vector<16x256xf32>
    %16 = arith.maximumf %14, %15 : vector<16x256xf32>
    %17 = arith.truncf %16 : vector<16x256xf32> to vector<16x256xbf16>
    %c0_12 = arith.constant 0 : index
    %c0_13 = arith.constant 0 : index
    %18 = vector.load %arg6[%c0_12, %c0_13] : memref<256x128xbf16, #tpu.memory_space<vmem>>, vector<256x128xbf16>
    %cst_14 = arith.constant dense<0.000000e+00> : vector<16x128xf32>
    %19 = tpu.matmul %17, %18, %cst_14 {dimension_numbers = #tpu.dot_dimension_numbers<[1], [0], [0], [1], [0, 0, 1, 1], [], []>} : vector<16x256xbf16>, vector<256x128xbf16>, vector<16x128xf32> -> vector<16x128xf32>
    %c0_15 = arith.constant 0 : index
    %c0_16 = arith.constant 0 : index
    %20 = vector.load %arg7[%c0_15, %c0_16] : memref<1x128xf32, #tpu.memory_space<vmem>>, vector<1x128xf32>
    %21 = vector.broadcast %20 : vector<1x128xf32> to vector<16x128xf32>
    %22 = arith.addf %19, %21 : vector<16x128xf32>
    %c0_17 = arith.constant 0 : index
    %c0_18 = arith.constant 0 : index
    %23 = vector.load %arg8[%c0_17, %c0_18] : memref<16x128xf32, #tpu.memory_space<vmem>>, vector<16x128xf32>
    tpu.vector_store %arg8[%c0_17, %c0_18], %22 {strides = array<i32>} : memref<16x128xf32, #tpu.memory_space<vmem>>, vector<16x128xf32>,
    return
  }
  func.func @transform_0(%arg0: i32) -> (i32, i32) {
    %c0_i32 = arith.constant 0 : i32
    %c0_i32_0 = arith.constant 0 : i32
    return %arg0, %c0_i32 : i32, i32
  }
  func.func @transform_1(%arg0: i32) -> (i32, i32) {
    %c0_i32 = arith.constant 0 : i32
    %c0_i32_0 = arith.constant 0 : i32
    %c0_i32_1 = arith.constant 0 : i32
    return %c0_i32, %c0_i32_0 : i32, i32
  }
  func.func @transform_2(%arg0: i32) -> (i32, i32) {
    %c0_i32 = arith.constant 0 : i32
    %c0_i32_0 = arith.constant 0 : i32
    %c0_i32_1 = arith.constant 0 : i32
    return %c0_i32, %c0_i32_0 : i32, i32
  }
  func.func @transform_3(%arg0: i32) -> (i32, i32) {
    %c0_i32 = arith.constant 0 : i32
    %c0_i32_0 = arith.constant 0 : i32
    %c0_i32_1 = arith.constant 0 : i32
    return %c0_i32, %c0_i32_0 : i32, i32
  }
  func.func @transform_4(%arg0: i32) -> (i32, i32) {
    %c0_i32 = arith.constant 0 : i32
    %c0_i32_0 = arith.constant 0 : i32
    %c0_i32_1 = arith.constant 0 : i32
    return %c0_i32, %c0_i32_0 : i32, i32
  }
  func.func @transform_5(%arg0: i32) -> (i32, i32) {
    %c0_i32 = arith.constant 0 : i32
    %c0_i32_0 = arith.constant 0 : i32
    %c0_i32_1 = arith.constant 0 : i32
    return %c0_i32, %c0_i32_0 : i32, i32
  }
  func.func @transform_6(%arg0: i32) -> (i32, i32) {
    %c0_i32 = arith.constant 0 : i32
    %c0_i32_0 = arith.constant 0 : i32
    %c0_i32_1 = arith.constant 0 : i32
    return %c0_i32, %c0_i32_0 : i32, i32
  }
  func.func @transform_7(%arg0: i32) -> (i32, i32) {
    %c0_i32 = arith.constant 0 : i32
    %c0_i32_0 = arith.constant 0 : i32
    return %arg0, %c0_i32 : i32, i32
  }
}

</mosaic_0001>

<llo_original>
// kernel: tpu_custom_call.1
$region0: #{tpu_custom_call.1}
  #allocation0 [shape = 'u32[]', space=smem, size = 0x4, offset = 0x4, fixed_abs, tag = 'smem constant byte address 0x4 - core index']
  #allocation1 [shape = 'u32[144,128]{1,0:T(1,128)}', space=vmem, size = 0x12000, scoped, tag = 'internal scratch']
  %s0 = inlined_call_operand.hbm [shape: f32[16,600], index: 0, kind: input, shape index: {}]
  %s1 = inlined_call_operand.hbm [shape: bf16[600,1024], index: 1, kind: input, shape index: {}]
  %s2 = inlined_call_operand.hbm [shape: f32[1,1024], index: 2, kind: input, shape index: {}]
  %s3 = inlined_call_operand.hbm [shape: bf16[1024,256], index: 3, kind: input, shape index: {}]
  %s4 = inlined_call_operand.hbm [shape: f32[1,256], index: 4, kind: input, shape index: {}]
  %s5 = inlined_call_operand.hbm [shape: bf16[256,128], index: 5, kind: input, shape index: {}]
  %s6 = inlined_call_operand.hbm [shape: f32[1,128], index: 6, kind: input, shape index: {}]
  %s7 = inlined_call_operand.hbm [shape: f32[16,128], index: 7, kind: output, shape index: {}]
  %s8 = sld [smem:[#allocation0]]
  $region66: #{tpu_custom_call.1} parent=0
    _
  %s10 = ssub.s32 1, %s8
  %s11 = scalar_select 0, %s10, %s8
  $region1: #{tpu_custom_call.1} parent=0
    #allocation2 [shape = 'u8[40960]{0}', space=vmem, size = 0xa000, scoped, tag = 'input window, operand 0, single buffered']
    #allocation3 [shape = 's32[1]{0}', space=sflag, size = 0x4, scoped, tag = 'scoped memory for tpu_custom_call.1']
    #allocation4 [shape = 's32[1]{0}', space=sflag, size = 0x4, scoped, tag = 'scoped memory for tpu_custom_call.1']
    #allocation5 [shape = 'u8[1228800]{0}', space=vmem, size = 0x12c000, scoped, tag = 'input window, operand 1, single buffered']
    #allocation6 [shape = 's32[1]{0}', space=sflag, size = 0x4, scoped, tag = 'scoped memory for tpu_custom_call.1']
    #allocation7 [shape = 'u8[4096]{0}', space=vmem, size = 0x1000, scoped, tag = 'input window, operand 2, single buffered']
    #allocation8 [shape = 'u8[524288]{0}', space=vmem, size = 0x80000, scoped, tag = 'input window, operand 3, single buffered']
    #allocation9 [shape = 's32[1]{0}', space=sflag, size = 0x4, scoped, tag = 'scoped memory for tpu_custom_call.1']
    #allocation10 [shape = 'u8[1024]{0}', space=vmem, size = 0x400, scoped, tag = 'input window, operand 4, single buffered']
    #allocation11 [shape = 'u8[65536]{0}', space=vmem, size = 0x10000, scoped, tag = 'input window, operand 5, single buffered']
    #allocation12 [shape = 's32[1]{0}', space=sflag, size = 0x4, scoped, tag = 'scoped memory for tpu_custom_call.1']
    #allocation13 [shape = 'u8[512]{0}', space=vmem, size = 0x400, scoped, tag = 'input window, operand 6, single buffered']
    #allocation14 [shape = 'u8[8192]{0}', space=vmem, size = 0x2000, scoped, tag = 'output window, operand 0, single buffered']
    %12 = vsyncpa [#allocation3], 0
    %13 = vsyncpa [#allocation6], 0
    %14 = vsyncpa [#allocation9], 0
    %15 = vsyncpa [#allocation12], 0
    %16 = vsyncpa [#allocation4], 0
    // Predicated region
    $region2: #{tpu_custom_call.1} parent=1 // pred_check
      _
    $region3: #{tpu_custom_call.1} parent=1 // pred_check_branch
      %18 = sbr.rel (0) target = $region5
    $region4: #{tpu_custom_call.1} parent=1 // pred_region
      %s20 = ssub.s32 1280, 1280
      %21 = vsyncadd [#allocation3], %s20
      %s22 = sshll.u32 [#allocation2], 4
      %s23 = int_to_ptr.vmem [resolvable:$true] %s22
      %28 = dma.hbm_to_vmem [thread:$0]  %s0, 1280, %s23, [#allocation3], 640, 640, 40
    $region5: #{tpu_custom_call.1} parent=1 // pred_fallthru
      _
    // Predicated region
    $region6: #{tpu_custom_call.1} parent=1 // pred_check
      _
    $region7: #{tpu_custom_call.1} parent=1 // pred_check_branch
      %30 = sbr.rel (0) target = $region9
    $region8: #{tpu_custom_call.1} parent=1 // pred_region
      %s32 = ssub.s32 38400, 38400
      %33 = vsyncadd [#allocation6], %s32
      %s34 = sshll.u32 [#allocation5], 4
      %s35 = int_to_ptr.vmem [resolvable:$true] %s34
      %40 = dma.hbm_to_vmem [thread:$0]  %s1, 38400, %s35, [#allocation6], 512, 512, 32
    $region9: #{tpu_custom_call.1} parent=1 // pred_fallthru
      _
    // Predicated region
    $region10: #{tpu_custom_call.1} parent=1 // pred_check
      _
    $region11: #{tpu_custom_call.1} parent=1 // pred_check_branch
      %42 = sbr.rel (0) target = $region13
    $region12: #{tpu_custom_call.1} parent=1 // pred_region
      %s44 = ssub.s32 128, 128
      %45 = vsyncadd [#allocation6], %s44
      %s47 = sshll.u32 [#allocation7], 4
      %s48 = int_to_ptr.vmem [resolvable:$true] %s47
      %50 = dma.hbm_to_vmem [thread:$0]  %s2, 128, %s48, [#allocation6]
    $region13: #{tpu_custom_call.1} parent=1 // pred_fallthru
      _
    // Predicated region
    $region14: #{tpu_custom_call.1} parent=1 // pred_check
      _
    $region15: #{tpu_custom_call.1} parent=1 // pred_check_branch
      %52 = sbr.rel (0) target = $region17
    $region16: #{tpu_custom_call.1} parent=1 // pred_region
      %s54 = ssub.s32 16384, 16384
      %55 = vsyncadd [#allocation9], %s54
      %s56 = sshll.u32 [#allocation8], 4
      %s57 = int_to_ptr.vmem [resolvable:$true] %s56
      %62 = dma.hbm_to_vmem [thread:$0]  %s3, 16384, %s57, [#allocation9], 128, 128, 8
    $region17: #{tpu_custom_call.1} parent=1 // pred_fallthru
      _
    // Predicated region
    $region18: #{tpu_custom_call.1} parent=1 // pred_check
      _
    $region19: #{tpu_custom_call.1} parent=1 // pred_check_branch
      %64 = sbr.rel (0) target = $region21
    $region20: #{tpu_custom_call.1} parent=1 // pred_region
      %s66 = ssub.s32 32, 32
      %67 = vsyncadd [#allocation9], %s66
      %s69 = sshll.u32 [#allocation10], 4
      %s70 = int_to_ptr.vmem [resolvable:$true] %s69
      %72 = dma.hbm_to_vmem [thread:$0]  %s4, 32, %s70, [#allocation9]
    $region21: #{tpu_custom_call.1} parent=1 // pred_fallthru
      _
    // Predicated region
    $region22: #{tpu_custom_call.1} parent=1 // pred_check
      _
    $region23: #{tpu_custom_call.1} parent=1 // pred_check_branch
      %74 = sbr.rel (0) target = $region25
    $region24: #{tpu_custom_call.1} parent=1 // pred_region
      %s76 = ssub.s32 2048, 2048
      %77 = vsyncadd [#allocation12], %s76
      %s78 = sshll.u32 [#allocation11], 4
      %s79 = int_to_ptr.vmem [resolvable:$true] %s78
      %84 = dma.hbm_to_vmem [thread:$0]  %s5, 2048, %s79, [#allocation12], 64, 64, 4
    $region25: #{tpu_custom_call.1} parent=1 // pred_fallthru
      _
    // Predicated region
    $region26: #{tpu_custom_call.1} parent=1 // pred_check
      _
    $region27: #{tpu_custom_call.1} parent=1 // pred_check_branch
      %86 = sbr.rel (0) target = $region29
    $region28: #{tpu_custom_call.1} parent=1 // pred_region
      %s88 = ssub.s32 16, 16
      %89 = vsyncadd [#allocation12], %s88
      %s91 = sshll.u32 [#allocation13], 4
      %s92 = int_to_ptr.vmem [resolvable:$true] %s91
      %94 = dma.hbm_to_vmem [thread:$0]  %s6, 16, %s92, [#allocation12]
    $region29: #{tpu_custom_call.1} parent=1 // pred_fallthru
      _
    // Predicated region
    $region30: #{tpu_custom_call.1} parent=1 // pred_check
      _
    $region31: #{tpu_custom_call.1} parent=1 // pred_check_branch
      %96 = sbr.rel (0) target = $region33
    $region32: #{tpu_custom_call.1} parent=1 // pred_region
      %97 = dma.done [#allocation3], 1280
    $region33: #{tpu_custom_call.1} parent=1 // pred_fallthru
      _
    // Predicated region
    $region34: #{tpu_custom_call.1} parent=1 // pred_check
      _
    $region35: #{tpu_custom_call.1} parent=1 // pred_check_branch
      %99 = sbr.rel (0) target = $region37
    $region36: #{tpu_custom_call.1} parent=1 // pred_region
      %100 = dma.done [#allocation6], 38400
    $region37: #{tpu_custom_call.1} parent=1 // pred_fallthru
      _
    // Predicated region
    $region38: #{tpu_custom_call.1} parent=1 // pred_check
      _
    $region39: #{tpu_custom_call.1} parent=1 // pred_check_branch
      %102 = sbr.rel (0) target = $region41
    $region40: #{tpu_custom_call.1} parent=1 // pred_region
      %103 = dma.done [#allocation6], 128
    $region41: #{tpu_custom_call.1} parent=1 // pred_fallthru
      _
    // Predicated region
    $region42: #{tpu_custom_call.1} parent=1 // pred_check
      _
    $region43: #{tpu_custom_call.1} parent=1 // pred_check_branch
      %105 = sbr.rel (0) target = $region45
    $region44: #{tpu_custom_call.1} parent=1 // pred_region
      %106 = dma.done [#allocation9], 16384
    $region45: #{tpu_custom_call.1} parent=1 // pred_fallthru
      _
    // Predicated region
    $region46: #{tpu_custom_call.1} parent=1 // pred_check
      _
    $region47: #{tpu_custom_call.1} parent=1 // pred_check_branch
      %108 = sbr.rel (0) target = $region49
    $region48: #{tpu_custom_call.1} parent=1 // pred_region
      %109 = dma.done [#allocation9], 32
    $region49: #{tpu_custom_call.1} parent=1 // pred_fallthru
      _
    // Predicated region
    $region50: #{tpu_custom_call.1} parent=1 // pred_check
      _
    $region51: #{tpu_custom_call.1} parent=1 // pred_check_branch
      %111 = sbr.rel (0) target = $region53
    $region52: #{tpu_custom_call.1} parent=1 // pred_region
      %112 = dma.done [#allocation12], 2048
    $region53: #{tpu_custom_call.1} parent=1 // pred_fallthru
      _
    // Predicated region
    $region54: #{tpu_custom_call.1} parent=1 // pred_check
      _
    $region55: #{tpu_custom_call.1} parent=1 // pred_check_branch
      %114 = sbr.rel (0) target = $region57
    $region56: #{tpu_custom_call.1} parent=1 // pred_region
      %115 = dma.done [#allocation12], 16
    $region57: #{tpu_custom_call.1} parent=1 // pred_fallthru
      _
    %v117 = vld [vmem:[#allocation2] sm:$0xff]
    %v118 = vld [vmem:[#allocation2 + $0x8] sm:$0xff]
    %v119 = vld [vmem:[#allocation2 + $0x10] sm:$0xff]
    %v120 = vld [vmem:[#allocation2 + $0x18] sm:$0xff]
    %v121 = vld [vmem:[#allocation2 + $0x20] sm:$0xff]
    %v122 = vld [vmem:[#allocation2 + $0x28] sm:$0xff]
    %v123 = vld [vmem:[#allocation2 + $0x30] sm:$0xff]
    %v124 = vld [vmem:[#allocation2 + $0x38] sm:$0xff]
    %v125 = vld [vmem:[#allocation2 + $0x40] sm:$0xff]
    %v126 = vld [vmem:[#allocation2 + $0x48] sm:$0xff]
    %v127 = vpack.c.bf16 %v122, %v117
    %v128 = vpack.c.bf16 %v123, %v118
    %v129 = vpack.c.bf16 %v124, %v119
    %v130 = vpack.c.bf16 %v125, %v120
    %v131 = vpack.c.bf16 %v126, %v121
    %v132 = vld [vmem:[#allocation5] sm:$0xff]
    %v133 = vld [vmem:[#allocation5 + $0x8] sm:$0xff]
    %v134 = vld [vmem:[#allocation5 + $0x10] sm:$0xff]
    %v135 = vld [vmem:[#allocation5 + $0x18] sm:$0xff]
    %v136 = vld [vmem:[#allocation5 + $0x20] sm:$0xff]
    %v137 = vld [vmem:[#allocation5 + $0x28] sm:$0xff]
    %v138 = vld [vmem:[#allocation5 + $0x30] sm:$0xff]
    %v139 = vld [vmem:[#allocation5 + $0x38] sm:$0xff]
    %v140 = vld [vmem:[#allocation5 + $0x40] sm:$0xff]
    %v141 = vld [vmem:[#allocation5 + $0x48] sm:$0xff]
    %v142 = vld [vmem:[#allocation5 + $0x50] sm:$0xff]
    %v143 = vld [vmem:[#allocation5 + $0x58] sm:$0xff]
    %v144 = vld [vmem:[#allocation5 + $0x60] sm:$0xff]
    %v145 = vld [vmem:[#allocation5 + $0x68] sm:$0xff]
    %v146 = vld [vmem:[#allocation5 + $0x70] sm:$0xff]
    %v147 = vld [vmem:[#allocation5 + $0x78] sm:$0xff]
    %v148 = vld [vmem:[#allocation5 + $0x80] sm:$0xff]
    %v149 = vld [vmem:[#allocation5 + $0x88] sm:$0xff]
    %v150 = vld [vmem:[#allocation5 + $0x90] sm:$0xff]
    %v151 = vld [vmem:[#allocation5 + $0x98] sm:$0xff]
    %v152 = vld [vmem:[#allocation5 + $0xa0] sm:$0xff]
    %v153 = vld [vmem:[#allocation5 + $0xa8] sm:$0xff]
    %v154 = vld [vmem:[#allocation5 + $0xb0] sm:$0xff]
    %v155 = vld [vmem:[#allocation5 + $0xb8] sm:$0xff]
    %v156 = vld [vmem:[#allocation5 + $0xc0] sm:$0xff]
    %v157 = vld [vmem:[#allocation5 + $0xc8] sm:$0xff]
    %v158 = vld [vmem:[#allocation5 + $0xd0] sm:$0xff]
    %v159 = vld [vmem:[#allocation5 + $0xd8] sm:$0xff]
    %v160 = vld [vmem:[#allocation5 + $0xe0] sm:$0xff]
    %v161 = vld [vmem:[#allocation5 + $0xe8] sm:$0xff]
    %v162 = vld [vmem:[#allocation5 + $0xf0] sm:$0xff]
    %v163 = vld [vmem:[#allocation5 + $0xf8] sm:$0xff]
    %v164 = vld [vmem:[#allocation5 + $0x100] sm:$0xff]
    %v165 = vld [vmem:[#allocation5 + $0x108] sm:$0xff]
    %v166 = vld [vmem:[#allocation5 + $0x110] sm:$0xff]
    %v167 = vld [vmem:[#allocation5 + $0x118] sm:$0xff]
    %v168 = vld [vmem:[#allocation5 + $0x120] sm:$0xff]
    %v169 = vld [vmem:[#allocation5 + $0x128] sm:$0xff]
    %v170 = vld [vmem:[#allocation5 + $0x130] sm:$0xff]
    %v171 = vld [vmem:[#allocation5 + $0x138] sm:$0xff]
    %v172 = vld [vmem:[#allocation5 + $0x140] sm:$0xff]
    %v173 = vld [vmem:[#allocation5 + $0x148] sm:$0xff]
    %v174 = vld [vmem:[#allocation5 + $0x150] sm:$0xff]
    %v175 = vld [vmem:[#allocation5 + $0x158] sm:$0xff]
    %v176 = vld [vmem:[#allocation5 + $0x160] sm:$0xff]
    %v177 = vld [vmem:[#allocation5 + $0x168] sm:$0xff]
    %v178 = vld [vmem:[#allocation5 + $0x170] sm:$0xff]
    %v179 = vld [vmem:[#allocation5 + $0x178] sm:$0xff]
    %v180 = vld [vmem:[#allocation5 + $0x180] sm:$0xff]
    %v181 = vld [vmem:[#allocation5 + $0x188] sm:$0xff]
    %v182 = vld [vmem:[#allocation5 + $0x190] sm:$0xff]
    %v183 = vld [vmem:[#allocation5 + $0x198] sm:$0xff]
    %v184 = vld [vmem:[#allocation5 + $0x1a0] sm:$0xff]
    %v185 = vld [vmem:[#allocation5 + $0x1a8] sm:$0xff]
    %v186 = vld [vmem:[#allocation5 + $0x1b0] sm:$0xff]
    %v187 = vld [vmem:[#allocation5 + $0x1b8] sm:$0xff]
    %v188 = vld [vmem:[#allocation5 + $0x1c0] sm:$0xff]
    %v189 = vld [vmem:[#allocation5 + $0x1c8] sm:$0xff]
    %v190 = vld [vmem:[#allocation5 + $0x1d0] sm:$0xff]
    %v191 = vld [vmem:[#allocation5 + $0x1d8] sm:$0xff]
    %v192 = vld [vmem:[#allocation5 + $0x1e0] sm:$0xff]
    %v193 = vld [vmem:[#allocation5 + $0x1e8] sm:$0xff]
    %v194 = vld [vmem:[#allocation5 + $0x1f0] sm:$0xff]
    %v195 = vld [vmem:[#allocation5 + $0x1f8] sm:$0xff]
    %v196 = vld [vmem:[#allocation5 + $0x200] sm:$0xff]
    %v197 = vld [vmem:[#allocation5 + $0x208] sm:$0xff]
    %v198 = vld [vmem:[#allocation5 + $0x210] sm:$0xff]
    %v199 = vld [vmem:[#allocation5 + $0x218] sm:$0xff]
    %v200 = vld [vmem:[#allocation5 + $0x220] sm:$0xff]
    %v201 = vld [vmem:[#allocation5 + $0x228] sm:$0xff]
    %v202 = vld [vmem:[#allocation5 + $0x230] sm:$0xff]
    %v203 = vld [vmem:[#allocation5 + $0x238] sm:$0xff]
    %v204 = vld [vmem:[#allocation5 + $0x240] sm:$0xff]
    %v205 = vld [vmem:[#allocation5 + $0x248] sm:$0xff]
    %v206 = vld [vmem:[#allocation5 + $0x250] sm:$0xff]
    %v207 = vld [vmem:[#allocation5 + $0x258] sm:$0xff]
    %v208 = vld [vmem:[#allocation5 + $0x260] sm:$0xff]
    %v209 = vld [vmem:[#allocation5 + $0x268] sm:$0xff]
    %v210 = vld [vmem:[#allocation5 + $0x270] sm:$0xff]
    %v211 = vld [vmem:[#allocation5 + $0x278] sm:$0xff]
    %v212 = vld [vmem:[#allocation5 + $0x280] sm:$0xff]
    %v213 = vld [vmem:[#allocation5 + $0x288] sm:$0xff]
    %v214 = vld [vmem:[#allocation5 + $0x290] sm:$0xff]
    %v215 = vld [vmem:[#allocation5 + $0x298] sm:$0xff]
    %v216 = vld [vmem:[#allocation5 + $0x2a0] sm:$0xff]
    %v217 = vld [vmem:[#allocation5 + $0x2a8] sm:$0xff]
    %v218 = vld [vmem:[#allocation5 + $0x2b0] sm:$0xff]
    %v219 = vld [vmem:[#allocation5 + $0x2b8] sm:$0xff]
    %v220 = vld [vmem:[#allocation5 + $0x2c0] sm:$0xff]
    %v221 = vld [vmem:[#allocation5 + $0x2c8] sm:$0xff]
    %v222 = vld [vmem:[#allocation5 + $0x2d0] sm:$0xff]
    %v223 = vld [vmem:[#allocation5 + $0x2d8] sm:$0xff]
    %v224 = vld [vmem:[#allocation5 + $0x2e0] sm:$0xff]
    %v225 = vld [vmem:[#allocation5 + $0x2e8] sm:$0xff]
    %v226 = vld [vmem:[#allocation5 + $0x2f0] sm:$0xff]
    %v227 = vld [vmem:[#allocation5 + $0x2f8] sm:$0xff]
    %v228 = vld [vmem:[#allocation5 + $0x300] sm:$0xff]
    %v229 = vld [vmem:[#allocation5 + $0x308] sm:$0xff]
    %v230 = vld [vmem:[#allocation5 + $0x310] sm:$0xff]
    %v231 = vld [vmem:[#allocation5 + $0x318] sm:$0xff]
    %v232 = vld [vmem:[#allocation5 + $0x320] sm:$0xff]
    %v233 = vld [vmem:[#allocation5 + $0x328] sm:$0xff]
    %v234 = vld [vmem:[#allocation5 + $0x330] sm:$0xff]
    %v235 = vld [vmem:[#allocation5 + $0x338] sm:$0xff]
    %v236 = vld [vmem:[#allocation5 + $0x340] sm:$0xff]
    %v237 = vld [vmem:[#allocation5 + $0x348] sm:$0xff]
    %v238 = vld [vmem:[#allocation5 + $0x350] sm:$0xff]
    %v239 = vld [vmem:[#allocation5 + $0x358] sm:$0xff]
    %v240 = vld [vmem:[#allocation5 + $0x360] sm:$0xff]
    %v241 = vld [vmem:[#allocation5 + $0x368] sm:$0xff]
    %v242 = vld [vmem:[#allocation5 + $0x370] sm:$0xff]
    %v243 = vld [vmem:[#allocation5 + $0x378] sm:$0xff]
    %v244 = vld [vmem:[#allocation5 + $0x380] sm:$0xff]
    %v245 = vld [vmem:[#allocation5 + $0x388] sm:$0xff]
    %v246 = vld [vmem:[#allocation5 + $0x390] sm:$0xff]
    %v247 = vld [vmem:[#allocation5 + $0x398] sm:$0xff]
    %v248 = vld [vmem:[#allocation5 + $0x3a0] sm:$0xff]
    %v249 = vld [vmem:[#allocation5 + $0x3a8] sm:$0xff]
    %v250 = vld [vmem:[#allocation5 + $0x3b0] sm:$0xff]
    %v251 = vld [vmem:[#allocation5 + $0x3b8] sm:$0xff]
    %v252 = vld [vmem:[#allocation5 + $0x3c0] sm:$0xff]
    %v253 = vld [vmem:[#allocation5 + $0x3c8] sm:$0xff]
    %v254 = vld [vmem:[#allocation5 + $0x3d0] sm:$0xff]
    %v255 = vld [vmem:[#allocation5 + $0x3d8] sm:$0xff]
    %v256 = vld [vmem:[#allocation5 + $0x3e0] sm:$0xff]
    %v257 = vld [vmem:[#allocation5 + $0x3e8] sm:$0xff]
    %v258 = vld [vmem:[#allocation5 + $0x3f0] sm:$0xff]
    %v259 = vld [vmem:[#allocation5 + $0x3f8] sm:$0xff]
    %v260 = vld [vmem:[#allocation5 + $0x400] sm:$0xff]
    %v261 = vld [vmem:[#allocation5 + $0x408] sm:$0xff]
    %v262 = vld [vmem:[#allocation5 + $0x410] sm:$0xff]
    %v263 = vld [vmem:[#allocation5 + $0x418] sm:$0xff]
    %v264 = vld [vmem:[#allocation5 + $0x420] sm:$0xff]
    %v265 = vld [vmem:[#allocation5 + $0x428] sm:$0xff]
    %v266 = vld [vmem:[#allocation5 + $0x430] sm:$0xff]
    %v267 = vld [vmem:[#allocation5 + $0x438] sm:$0xff]
    %v268 = vld [vmem:[#allocation5 + $0x440] sm:$0xff]
    %v269 = vld [vmem:[#allocation5 + $0x448] sm:$0xff]
    %v270 = vld [vmem:[#allocation5 + $0x450] sm:$0xff]
    %v271 = vld [vmem:[#allocation5 + $0x458] sm:$0xff]
    %v272 = vld [vmem:[#allocation5 + $0x460] sm:$0xff]
    %v273 = vld [vmem:[#allocation5 + $0x468] sm:$0xff]
    %v274 = vld [vmem:[#allocation5 + $0x470] sm:$0xff]
    %v275 = vld [vmem:[#allocation5 + $0x478] sm:$0xff]
    %v276 = vld [vmem:[#allocation5 + $0x480] sm:$0xff]
    %v277 = vld [vmem:[#allocation5 + $0x488] sm:$0xff]
    %v278 = vld [vmem:[#allocation5 + $0x490] sm:$0xff]
    %v279 = vld [vmem:[#allocation5 + $0x498] sm:$0xff]
    %v280 = vld [vmem:[#allocation5 + $0x4a0] sm:$0xff]
    %v281 = vld [vmem:[#allocation5 + $0x4a8] sm:$0xff]
    %v282 = vld [vmem:[#allocation5 + $0x4b0] sm:$0xff]
    %v283 = vld [vmem:[#allocation5 + $0x4b8] sm:$0xff]
    %v284 = vld [vmem:[#allocation5 + $0x4c0] sm:$0xff]
    %v285 = vld [vmem:[#allocation5 + $0x4c8] sm:$0xff]
    %v286 = vld [vmem:[#allocation5 + $0x4d0] sm:$0xff]
    %v287 = vld [vmem:[#allocation5 + $0x4d8] sm:$0xff]
    %v288 = vld [vmem:[#allocation5 + $0x4e0] sm:$0xff]
    %v289 = vld [vmem:[#allocation5 + $0x4e8] sm:$0xff]
    %v290 = vld [vmem:[#allocation5 + $0x4f0] sm:$0xff]
    %v291 = vld [vmem:[#allocation5 + $0x4f8] sm:$0xff]
    %v292 = vld [vmem:[#allocation5 + $0x500] sm:$0xff]
    %v293 = vld [vmem:[#allocation5 + $0x508] sm:$0xff]
    %v294 = vld [vmem:[#allocation5 + $0x510] sm:$0xff]
    %v295 = vld [vmem:[#allocation5 + $0x518] sm:$0xff]
    %v296 = vld [vmem:[#allocation5 + $0x520] sm:$0xff]
    %v297 = vld [vmem:[#allocation5 + $0x528] sm:$0xff]
    %v298 = vld [vmem:[#allocation5 + $0x530] sm:$0xff]
    %v299 = vld [vmem:[#allocation5 + $0x538] sm:$0xff]
    %v300 = vld [vmem:[#allocation5 + $0x540] sm:$0xff]
    %v301 = vld [vmem:[#allocation5 + $0x548] sm:$0xff]
    %v302 = vld [vmem:[#allocation5 + $0x550] sm:$0xff]
    %v303 = vld [vmem:[#allocation5 + $0x558] sm:$0xff]
    %v304 = vld [vmem:[#allocation5 + $0x560] sm:$0xff]
    %v305 = vld [vmem:[#allocation5 + $0x568] sm:$0xff]
    %v306 = vld [vmem:[#allocation5 + $0x570] sm:$0xff]
    %v307 = vld [vmem:[#allocation5 + $0x578] sm:$0xff]
    %v308 = vld [vmem:[#allocation5 + $0x580] sm:$0xff]
    %v309 = vld [vmem:[#allocation5 + $0x588] sm:$0xff]
    %v310 = vld [vmem:[#allocation5 + $0x590] sm:$0xff]
    %v311 = vld [vmem:[#allocation5 + $0x598] sm:$0xff]
    %v312 = vld [vmem:[#allocation5 + $0x5a0] sm:$0xff]
    %v313 = vld [vmem:[#allocation5 + $0x5a8] sm:$0xff]
    %v314 = vld [vmem:[#allocation5 + $0x5b0] sm:$0xff]
    %v315 = vld [vmem:[#allocation5 + $0x5b8] sm:$0xff]
    %v316 = vld [vmem:[#allocation5 + $0x5c0] sm:$0xff]
    %v317 = vld [vmem:[#allocation5 + $0x5c8] sm:$0xff]
    %v318 = vld [vmem:[#allocation5 + $0x5d0] sm:$0xff]
    %v319 = vld [vmem:[#allocation5 + $0x5d8] sm:$0xff]
    %v320 = vld [vmem:[#allocation5 + $0x5e0] sm:$0xff]
    %v321 = vld [vmem:[#allocation5 + $0x5e8] sm:$0xff]
    %v322 = vld [vmem:[#allocation5 + $0x5f0] sm:$0xff]
    %v323 = vld [vmem:[#allocation5 + $0x5f8] sm:$0xff]
    %v324 = vld [vmem:[#allocation5 + $0x600] sm:$0xff]
    %v325 = vld [vmem:[#allocation5 + $0x608] sm:$0xff]
    %v326 = vld [vmem:[#allocation5 + $0x610] sm:$0xff]
    %v327 = vld [vmem:[#allocation5 + $0x618] sm:$0xff]
    %v328 = vld [vmem:[#allocation5 + $0x620] sm:$0xff]
    %v329 = vld [vmem:[#allocation5 + $0x628] sm:$0xff]
    %v330 = vld [vmem:[#allocation5 + $0x630] sm:$0xff]
    %v331 = vld [vmem:[#allocation5 + $0x638] sm:$0xff]
    %v332 = vld [vmem:[#allocation5 + $0x640] sm:$0xff]
    %v333 = vld [vmem:[#allocation5 + $0x648] sm:$0xff]
    %v334 = vld [vmem:[#allocation5 + $0x650] sm:$0xff]
    %v335 = vld [vmem:[#allocation5 + $0x658] sm:$0xff]
    %v336 = vld [vmem:[#allocation5 + $0x660] sm:$0xff]
    %v337 = vld [vmem:[#allocation5 + $0x668] sm:$0xff]
    %v338 = vld [vmem:[#allocation5 + $0x670] sm:$0xff]
    %v339 = vld [vmem:[#allocation5 + $0x678] sm:$0xff]
    %v340 = vld [vmem:[#allocation5 + $0x680] sm:$0xff]
    %v341 = vld [vmem:[#allocation5 + $0x688] sm:$0xff]
    %v342 = vld [vmem:[#allocation5 + $0x690] sm:$0xff]
    %v343 = vld [vmem:[#allocation5 + $0x698] sm:$0xff]
    %v344 = vld [vmem:[#allocation5 + $0x6a0] sm:$0xff]
    %v345 = vld [vmem:[#allocation5 + $0x6a8] sm:$0xff]
    %v346 = vld [vmem:[#allocation5 + $0x6b0] sm:$0xff]
    %v347 = vld [vmem:[#allocation5 + $0x6b8] sm:$0xff]
    %v348 = vld [vmem:[#allocation5 + $0x6c0] sm:$0xff]
    %v349 = vld [vmem:[#allocation5 + $0x6c8] sm:$0xff]
    %v350 = vld [vmem:[#allocation5 + $0x6d0] sm:$0xff]
    %v351 = vld [vmem:[#allocation5 + $0x6d8] sm:$0xff]
    %v352 = vld [vmem:[#allocation5 + $0x6e0] sm:$0xff]
    %v353 = vld [vmem:[#allocation5 + $0x6e8] sm:$0xff]
    %v354 = vld [vmem:[#allocation5 + $0x6f0] sm:$0xff]
    %v355 = vld [vmem:[#allocation5 + $0x6f8] sm:$0xff]
    %v356 = vld [vmem:[#allocation5 + $0x700] sm:$0xff]
    %v357 = vld [vmem:[#allocation5 + $0x708] sm:$0xff]
    %v358 = vld [vmem:[#allocation5 + $0x710] sm:$0xff]
    %v359 = vld [vmem:[#allocation5 + $0x718] sm:$0xff]
    %v360 = vld [vmem:[#allocation5 + $0x720] sm:$0xff]
    %v361 = vld [vmem:[#allocation5 + $0x728] sm:$0xff]
    %v362 = vld [vmem:[#allocation5 + $0x730] sm:$0xff]
    %v363 = vld [vmem:[#allocation5 + $0x738] sm:$0xff]
    %v364 = vld [vmem:[#allocation5 + $0x740] sm:$0xff]
    %v365 = vld [vmem:[#allocation5 + $0x748] sm:$0xff]
    %v366 = vld [vmem:[#allocation5 + $0x750] sm:$0xff]
    %v367 = vld [vmem:[#allocation5 + $0x758] sm:$0xff]
    %v368 = vld [vmem:[#allocation5 + $0x760] sm:$0xff]
    %v369 = vld [vmem:[#allocation5 + $0x768] sm:$0xff]
    %v370 = vld [vmem:[#allocation5 + $0x770] sm:$0xff]
    %v371 = vld [vmem:[#allocation5 + $0x778] sm:$0xff]
    %v372 = vld [vmem:[#allocation5 + $0x780] sm:$0xff]
    %v373 = vld [vmem:[#allocation5 + $0x788] sm:$0xff]
    %v374 = vld [vmem:[#allocation5 + $0x790] sm:$0xff]
    %v375 = vld [vmem:[#allocation5 + $0x798] sm:$0xff]
    %v376 = vld [vmem:[#allocation5 + $0x7a0] sm:$0xff]
    %v377 = vld [vmem:[#allocation5 + $0x7a8] sm:$0xff]
    %v378 = vld [vmem:[#allocation5 + $0x7b0] sm:$0xff]
    %v379 = vld [vmem:[#allocation5 + $0x7b8] sm:$0xff]
    %v380 = vld [vmem:[#allocation5 + $0x7c0] sm:$0xff]
    %v381 = vld [vmem:[#allocation5 + $0x7c8] sm:$0xff]
    %v382 = vld [vmem:[#allocation5 + $0x7d0] sm:$0xff]
    %v383 = vld [vmem:[#allocation5 + $0x7d8] sm:$0xff]
    %v384 = vld [vmem:[#allocation5 + $0x7e0] sm:$0xff]
    %v385 = vld [vmem:[#allocation5 + $0x7e8] sm:$0xff]
    %v386 = vld [vmem:[#allocation5 + $0x7f0] sm:$0xff]
    %v387 = vld [vmem:[#allocation5 + $0x7f8] sm:$0xff]
    %v388 = vld [vmem:[#allocation5 + $0x800] sm:$0xff]
    %v389 = vld [vmem:[#allocation5 + $0x808] sm:$0xff]
    %v390 = vld [vmem:[#allocation5 + $0x810] sm:$0xff]
    %v391 = vld [vmem:[#allocation5 + $0x818] sm:$0xff]
    %v392 = vld [vmem:[#allocation5 + $0x820] sm:$0xff]
    %v393 = vld [vmem:[#allocation5 + $0x828] sm:$0xff]
    %v394 = vld [vmem:[#allocation5 + $0x830] sm:$0xff]
    %v395 = vld [vmem:[#allocation5 + $0x838] sm:$0xff]
    %v396 = vld [vmem:[#allocation5 + $0x840] sm:$0xff]
    %v397 = vld [vmem:[#allocation5 + $0x848] sm:$0xff]
    %v398 = vld [vmem:[#allocation5 + $0x850] sm:$0xff]
    %v399 = vld [vmem:[#allocation5 + $0x858] sm:$0xff]
    %v400 = vld [vmem:[#allocation5 + $0x860] sm:$0xff]
    %v401 = vld [vmem:[#allocation5 + $0x868] sm:$0xff]
    %v402 = vld [vmem:[#allocation5 + $0x870] sm:$0xff]
    %v403 = vld [vmem:[#allocation5 + $0x878] sm:$0xff]
    %v404 = vld [vmem:[#allocation5 + $0x880] sm:$0xff]
    %v405 = vld [vmem:[#allocation5 + $0x888] sm:$0xff]
    %v406 = vld [vmem:[#allocation5 + $0x890] sm:$0xff]
    %v407 = vld [vmem:[#allocation5 + $0x898] sm:$0xff]
    %v408 = vld [vmem:[#allocation5 + $0x8a0] sm:$0xff]
    %v409 = vld [vmem:[#allocation5 + $0x8a8] sm:$0xff]
    %v410 = vld [vmem:[#allocation5 + $0x8b0] sm:$0xff]
    %v411 = vld [vmem:[#allocation5 + $0x8b8] sm:$0xff]
    %v412 = vld [vmem:[#allocation5 + $0x8c0] sm:$0xff]
    %v413 = vld [vmem:[#allocation5 + $0x8c8] sm:$0xff]
    %v414 = vld [vmem:[#allocation5 + $0x8d0] sm:$0xff]
    %v415 = vld [vmem:[#allocation5 + $0x8d8] sm:$0xff]
    %v416 = vld [vmem:[#allocation5 + $0x8e0] sm:$0xff]
    %v417 = vld [vmem:[#allocation5 + $0x8e8] sm:$0xff]
    %v418 = vld [vmem:[#allocation5 + $0x8f0] sm:$0xff]
    %v419 = vld [vmem:[#allocation5 + $0x8f8] sm:$0xff]
    %v420 = vld [vmem:[#allocation5 + $0x900] sm:$0xff]
    %v421 = vld [vmem:[#allocation5 + $0x908] sm:$0xff]
    %v422 = vld [vmem:[#allocation5 + $0x910] sm:$0xff]
    %v423 = vld [vmem:[#allocation5 + $0x918] sm:$0xff]
    %v424 = vld [vmem:[#allocation5 + $0x920] sm:$0xff]
    %v425 = vld [vmem:[#allocation5 + $0x928] sm:$0xff]
    %v426 = vld [vmem:[#allocation5 + $0x930] sm:$0xff]
    %v427 = vld [vmem:[#allocation5 + $0x938] sm:$0xff]
    %v428 = vld [vmem:[#allocation5 + $0x940] sm:$0xff]
    %v429 = vld [vmem:[#allocation5 + $0x948] sm:$0xff]
    %v430 = vld [vmem:[#allocation5 + $0x950] sm:$0xff]
    %v431 = vld [vmem:[#allocation5 + $0x958] sm:$0xff]
    %v432 = vld [vmem:[#allocation7] sm:$0xff]
    %v434 = vlaneseq
    %v435 = vshrl.u32 %v434, 7
    %v436 = vsub.s32 0, %v435
    %v437 = vrot.slane %v432, %v436
    %v438 = vlaneseq
    %v439 = vshrl.u32 %v438, 7
    %v440 = vsub.s32 1, %v439
    %v441 = vrot.slane %v432, %v440
    %v442 = vlaneseq
    %v443 = vshrl.u32 %v442, 7
    %v444 = vsub.s32 2, %v443
    %v445 = vrot.slane %v432, %v444
    %v446 = vlaneseq
    %v447 = vshrl.u32 %v446, 7
    %v448 = vsub.s32 3, %v447
    %v449 = vrot.slane %v432, %v448
    %v450 = vlaneseq
    %v451 = vshrl.u32 %v450, 7
    %v452 = vsub.s32 4, %v451
    %v453 = vrot.slane %v432, %v452
    %v454 = vlaneseq
    %v455 = vshrl.u32 %v454, 7
    %v456 = vsub.s32 5, %v455
    %v457 = vrot.slane %v432, %v456
    %v458 = vlaneseq
    %v459 = vshrl.u32 %v458, 7
    %v460 = vsub.s32 6, %v459
    %v461 = vrot.slane %v432, %v460
    %v462 = vlaneseq
    %v463 = vshrl.u32 %v462, 7
    %v464 = vsub.s32 7, %v463
    %v465 = vrot.slane %v432, %v464
    %v774 = vunpack.c.l.b16 %v132
    %v775 = vunpack.c.h.b16 %v132
    %v776 = vunpack.c.l.b16 %v133
    %v777 = vunpack.c.h.b16 %v133
    %v778 = vunpack.c.l.b16 %v134
    %v779 = vunpack.c.h.b16 %v134
    %v780 = vunpack.c.l.b16 %v135
    %v781 = vunpack.c.h.b16 %v135
    %v782 = vunpack.c.l.b16 %v136
    %v783 = vunpack.c.h.b16 %v136
    %v784 = vunpack.c.l.b16 %v137
    %v785 = vunpack.c.h.b16 %v137
    %v786 = vunpack.c.l.b16 %v138
    %v787 = vunpack.c.h.b16 %v138
    %v788 = vunpack.c.l.b16 %v139
    %v789 = vunpack.c.h.b16 %v139
    %v790 = vunpack.c.l.b16 %v140
    %v791 = vunpack.c.h.b16 %v140
    %v792 = vunpack.c.l.b16 %v141
    %v793 = vunpack.c.h.b16 %v141
    %v794 = vunpack.c.l.b16 %v142
    %v795 = vunpack.c.h.b16 %v142
    %v796 = vunpack.c.l.b16 %v143
    %v797 = vunpack.c.h.b16 %v143
    %v798 = vunpack.c.l.b16 %v144
    %v799 = vunpack.c.h.b16 %v144
    %v800 = vunpack.c.l.b16 %v145
    %v801 = vunpack.c.h.b16 %v145
    %v802 = vunpack.c.l.b16 %v146
    %v803 = vunpack.c.h.b16 %v146
    %v804 = vunpack.c.l.b16 %v147
    %v805 = vunpack.c.h.b16 %v147
    %v806 = vunpack.c.l.b16 %v148
    %v807 = vunpack.c.h.b16 %v148
    %v808 = vunpack.c.l.b16 %v149
    %v809 = vunpack.c.h.b16 %v149
    %v810 = vunpack.c.l.b16 %v150
    %v811 = vunpack.c.h.b16 %v150
    %v812 = vunpack.c.l.b16 %v151
    %v813 = vunpack.c.h.b16 %v151
    %v814 = vunpack.c.l.b16 %v152
    %v815 = vunpack.c.h.b16 %v152
    %v816 = vunpack.c.l.b16 %v153
    %v817 = vunpack.c.h.b16 %v153
    %v818 = vunpack.c.l.b16 %v154
    %v819 = vunpack.c.h.b16 %v154
    %v820 = vunpack.c.l.b16 %v155
    %v821 = vunpack.c.h.b16 %v155
    %v822 = vunpack.c.l.b16 %v156
    %v823 = vunpack.c.h.b16 %v156
    %v824 = vunpack.c.l.b16 %v157
    %v825 = vunpack.c.h.b16 %v157
    %v826 = vunpack.c.l.b16 %v158
    %v827 = vunpack.c.h.b16 %v158
    %v828 = vunpack.c.l.b16 %v159
    %v829 = vunpack.c.h.b16 %v159
    %v830 = vunpack.c.l.b16 %v160
    %v831 = vunpack.c.h.b16 %v160
    %v832 = vunpack.c.l.b16 %v161
    %v833 = vunpack.c.h.b16 %v161
    %v834 = vunpack.c.l.b16 %v162
    %v835 = vunpack.c.h.b16 %v162
    %v836 = vunpack.c.l.b16 %v163
    %v837 = vunpack.c.h.b16 %v163
    %v838 = vunpack.c.l.b16 %v164
    %v839 = vunpack.c.h.b16 %v164
    %v840 = vunpack.c.l.b16 %v165
    %v841 = vunpack.c.h.b16 %v165
    %v842 = vunpack.c.l.b16 %v166
    %v843 = vunpack.c.h.b16 %v166
    %v844 = vunpack.c.l.b16 %v167
    %v845 = vunpack.c.h.b16 %v167
    %v846 = vunpack.c.l.b16 %v168
    %v847 = vunpack.c.h.b16 %v168
    %v848 = vunpack.c.l.b16 %v169
    %v849 = vunpack.c.h.b16 %v169
    %v850 = vunpack.c.l.b16 %v170
    %v851 = vunpack.c.h.b16 %v170
    %v852 = vunpack.c.l.b16 %v171
    %v853 = vunpack.c.h.b16 %v171
    %v854 = vunpack.c.l.b16 %v172
    %v855 = vunpack.c.h.b16 %v172
    %v856 = vunpack.c.l.b16 %v173
    %v857 = vunpack.c.h.b16 %v173
    %v858 = vunpack.c.l.b16 %v174
    %v859 = vunpack.c.h.b16 %v174
    %v860 = vunpack.c.l.b16 %v175
    %v861 = vunpack.c.h.b16 %v175
    %v862 = vunpack.c.l.b16 %v176
    %v863 = vunpack.c.h.b16 %v176
    %v864 = vunpack.c.l.b16 %v177
    %v865 = vunpack.c.h.b16 %v177
    %v866 = vunpack.c.l.b16 %v178
    %v867 = vunpack.c.h.b16 %v178
    %v868 = vunpack.c.l.b16 %v179
    %v869 = vunpack.c.h.b16 %v179
    %v870 = vunpack.c.l.b16 %v180
    %v871 = vunpack.c.h.b16 %v180
    %v872 = vunpack.c.l.b16 %v181
    %v873 = vunpack.c.h.b16 %v181
    %v874 = vunpack.c.l.b16 %v182
    %v875 = vunpack.c.h.b16 %v182
    %v876 = vunpack.c.l.b16 %v183
    %v877 = vunpack.c.h.b16 %v183
    %v878 = vunpack.c.l.b16 %v184
    %v879 = vunpack.c.h.b16 %v184
    %v880 = vunpack.c.l.b16 %v185
    %v881 = vunpack.c.h.b16 %v185
    %v882 = vunpack.c.l.b16 %v186
    %v883 = vunpack.c.h.b16 %v186
    %v884 = vunpack.c.l.b16 %v187
    %v885 = vunpack.c.h.b16 %v187
    %v886 = vunpack.c.l.b16 %v188
    %v887 = vunpack.c.h.b16 %v188
    %v888 = vunpack.c.l.b16 %v189
    %v889 = vunpack.c.h.b16 %v189
    %v890 = vunpack.c.l.b16 %v190
    %v891 = vunpack.c.h.b16 %v190
    %v892 = vunpack.c.l.b16 %v191
    %v893 = vunpack.c.h.b16 %v191
    %v894 = vunpack.c.l.b16 %v192
    %v895 = vunpack.c.h.b16 %v192
    %v896 = vunpack.c.l.b16 %v193
    %v897 = vunpack.c.h.b16 %v193
    %v898 = vunpack.c.l.b16 %v194
    %v899 = vunpack.c.h.b16 %v194
    %v900 = vunpack.c.l.b16 %v195
    %v901 = vunpack.c.h.b16 %v195
    %v902 = vunpack.c.l.b16 %v196
    %v903 = vunpack.c.h.b16 %v196
    %v904 = vunpack.c.l.b16 %v197
    %v905 = vunpack.c.h.b16 %v197
    %v906 = vunpack.c.l.b16 %v198
    %v907 = vunpack.c.h.b16 %v198
    %v908 = vunpack.c.l.b16 %v199
    %v909 = vunpack.c.h.b16 %v199
    %v910 = vunpack.c.l.b16 %v200
    %v911 = vunpack.c.h.b16 %v200
    %v912 = vunpack.c.l.b16 %v201
    %v913 = vunpack.c.h.b16 %v201
    %v914 = vunpack.c.l.b16 %v202
    %v915 = vunpack.c.h.b16 %v202
    %v916 = vunpack.c.l.b16 %v203
    %v917 = vunpack.c.h.b16 %v203
    %v918 = vunpack.c.l.b16 %v204
    %v919 = vunpack.c.h.b16 %v204
    %v920 = vunpack.c.l.b16 %v205
    %v921 = vunpack.c.h.b16 %v205
    %v922 = vunpack.c.l.b16 %v206
    %v923 = vunpack.c.h.b16 %v206
    %v924 = vunpack.c.l.b16 %v207
    %v925 = vunpack.c.h.b16 %v207
    %v926 = vunpack.c.l.b16 %v208
    %v927 = vunpack.c.h.b16 %v208
    %v928 = vunpack.c.l.b16 %v209
    %v929 = vunpack.c.h.b16 %v209
    %v930 = vunpack.c.l.b16 %v210
    %v931 = vunpack.c.h.b16 %v210
    %v932 = vunpack.c.l.b16 %v211
    %v933 = vunpack.c.h.b16 %v211
    %v934 = vunpack.c.l.b16 %v212
    %v935 = vunpack.c.h.b16 %v212
    %v936 = vunpack.c.l.b16 %v213
    %v937 = vunpack.c.h.b16 %v213
    %v938 = vunpack.c.l.b16 %v214
    %v939 = vunpack.c.h.b16 %v214
    %v940 = vunpack.c.l.b16 %v215
    %v941 = vunpack.c.h.b16 %v215
    %v942 = vunpack.c.l.b16 %v216
    %v943 = vunpack.c.h.b16 %v216
    %v944 = vunpack.c.l.b16 %v217
    %v945 = vunpack.c.h.b16 %v217
    %v946 = vunpack.c.l.b16 %v218
    %v947 = vunpack.c.h.b16 %v218
    %v948 = vunpack.c.l.b16 %v219
    %v949 = vunpack.c.h.b16 %v219
    %v950 = vunpack.c.l.b16 %v220
    %v951 = vunpack.c.h.b16 %v220
    %v952 = vunpack.c.l.b16 %v221
    %v953 = vunpack.c.h.b16 %v221
    %v954 = vunpack.c.l.b16 %v222
    %v955 = vunpack.c.h.b16 %v222
    %v956 = vunpack.c.l.b16 %v223
    %v957 = vunpack.c.h.b16 %v223
    %v958 = vunpack.c.l.b16 %v224
    %v959 = vunpack.c.h.b16 %v224
    %v960 = vunpack.c.l.b16 %v225
    %v961 = vunpack.c.h.b16 %v225
    %v962 = vunpack.c.l.b16 %v226
    %v963 = vunpack.c.h.b16 %v226
    %v964 = vunpack.c.l.b16 %v227
    %v965 = vunpack.c.h.b16 %v227
    %v966 = vunpack.c.l.b16 %v228
    %v967 = vunpack.c.h.b16 %v228
    %v968 = vunpack.c.l.b16 %v229
    %v969 = vunpack.c.h.b16 %v229
    %v970 = vunpack.c.l.b16 %v230
    %v971 = vunpack.c.h.b16 %v230
    %v972 = vunpack.c.l.b16 %v231
    %v973 = vunpack.c.h.b16 %v231
    %v974 = vunpack.c.l.b16 %v232
    %v975 = vunpack.c.h.b16 %v232
    %v976 = vunpack.c.l.b16 %v233
    %v977 = vunpack.c.h.b16 %v233
    %v978 = vunpack.c.l.b16 %v234
    %v979 = vunpack.c.h.b16 %v234
    %v980 = vunpack.c.l.b16 %v235
    %v981 = vunpack.c.h.b16 %v235
    %v982 = vunpack.c.l.b16 %v236
    %v983 = vunpack.c.h.b16 %v236
    %v984 = vunpack.c.l.b16 %v237
    %v985 = vunpack.c.h.b16 %v237
    %v986 = vunpack.c.l.b16 %v238
    %v987 = vunpack.c.h.b16 %v238
    %v988 = vunpack.c.l.b16 %v239
    %v989 = vunpack.c.h.b16 %v239
    %v990 = vunpack.c.l.b16 %v240
    %v991 = vunpack.c.h.b16 %v240
    %v992 = vunpack.c.l.b16 %v241
    %v993 = vunpack.c.h.b16 %v241
    %v994 = vunpack.c.l.b16 %v242
    %v995 = vunpack.c.h.b16 %v242
    %v996 = vunpack.c.l.b16 %v243
    %v997 = vunpack.c.h.b16 %v243
    %v998 = vunpack.c.l.b16 %v244
    %v999 = vunpack.c.h.b16 %v244
    %v1000 = vunpack.c.l.b16 %v245
    %v1001 = vunpack.c.h.b16 %v245
    %v1002 = vunpack.c.l.b16 %v246
    %v1003 = vunpack.c.h.b16 %v246
    %v1004 = vunpack.c.l.b16 %v247
    %v1005 = vunpack.c.h.b16 %v247
    %v1006 = vunpack.c.l.b16 %v248
    %v1007 = vunpack.c.h.b16 %v248
    %v1008 = vunpack.c.l.b16 %v249
    %v1009 = vunpack.c.h.b16 %v249
    %v1010 = vunpack.c.l.b16 %v250
    %v1011 = vunpack.c.h.b16 %v250
    %v1012 = vunpack.c.l.b16 %v251
    %v1013 = vunpack.c.h.b16 %v251
    %v1014 = vunpack.c.l.b16 %v252
    %v1015 = vunpack.c.h.b16 %v252
    %v1016 = vunpack.c.l.b16 %v253
    %v1017 = vunpack.c.h.b16 %v253
    %v1018 = vunpack.c.l.b16 %v254
    %v1019 = vunpack.c.h.b16 %v254
    %v1020 = vunpack.c.l.b16 %v255
    %v1021 = vunpack.c.h.b16 %v255
    %v1022 = vunpack.c.l.b16 %v256
    %v1023 = vunpack.c.h.b16 %v256
    %v1024 = vunpack.c.l.b16 %v257
    %v1025 = vunpack.c.h.b16 %v257
    %v1026 = vunpack.c.l.b16 %v258
    %v1027 = vunpack.c.h.b16 %v258
    %v1028 = vunpack.c.l.b16 %v259
    %v1029 = vunpack.c.h.b16 %v259
    %v1030 = vunpack.c.l.b16 %v260
    %v1031 = vunpack.c.h.b16 %v260
    %v1032 = vunpack.c.l.b16 %v261
    %v1033 = vunpack.c.h.b16 %v261
    %v1034 = vunpack.c.l.b16 %v262
    %v1035 = vunpack.c.h.b16 %v262
    %v1036 = vunpack.c.l.b16 %v263
    %v1037 = vunpack.c.h.b16 %v263
    %v1038 = vunpack.c.l.b16 %v264
    %v1039 = vunpack.c.h.b16 %v264
    %v1040 = vunpack.c.l.b16 %v265
    %v1041 = vunpack.c.h.b16 %v265
    %v1042 = vunpack.c.l.b16 %v266
    %v1043 = vunpack.c.h.b16 %v266
    %v1044 = vunpack.c.l.b16 %v267
    %v1045 = vunpack.c.h.b16 %v267
    %v1046 = vunpack.c.l.b16 %v268
    %v1047 = vunpack.c.h.b16 %v268
    %v1048 = vunpack.c.l.b16 %v269
    %v1049 = vunpack.c.h.b16 %v269
    %v1050 = vunpack.c.l.b16 %v270
    %v1051 = vunpack.c.h.b16 %v270
    %v1052 = vunpack.c.l.b16 %v271
    %v1053 = vunpack.c.h.b16 %v271
    %v1054 = vunpack.c.l.b16 %v272
    %v1055 = vunpack.c.h.b16 %v272
    %v1056 = vunpack.c.l.b16 %v273
    %v1057 = vunpack.c.h.b16 %v273
    %v1058 = vunpack.c.l.b16 %v274
    %v1059 = vunpack.c.h.b16 %v274
    %v1060 = vunpack.c.l.b16 %v275
    %v1061 = vunpack.c.h.b16 %v275
    %v1062 = vunpack.c.l.b16 %v276
    %v1063 = vunpack.c.h.b16 %v276
    %v1064 = vunpack.c.l.b16 %v277
    %v1065 = vunpack.c.h.b16 %v277
    %v1066 = vunpack.c.l.b16 %v278
    %v1067 = vunpack.c.h.b16 %v278
    %v1068 = vunpack.c.l.b16 %v279
    %v1069 = vunpack.c.h.b16 %v279
    %v1070 = vunpack.c.l.b16 %v280
    %v1071 = vunpack.c.h.b16 %v280
    %v1072 = vunpack.c.l.b16 %v281
    %v1073 = vunpack.c.h.b16 %v281
    %v1074 = vunpack.c.l.b16 %v282
    %v1075 = vunpack.c.h.b16 %v282
    %v1076 = vunpack.c.l.b16 %v283
    %v1077 = vunpack.c.h.b16 %v283
    %v1078 = vunpack.c.l.b16 %v284
    %v1079 = vunpack.c.h.b16 %v284
    %v1080 = vunpack.c.l.b16 %v285
    %v1081 = vunpack.c.h.b16 %v285
    %v1082 = vunpack.c.l.b16 %v286
    %v1083 = vunpack.c.h.b16 %v286
    %v1084 = vunpack.c.l.b16 %v287
    %v1085 = vunpack.c.h.b16 %v287
    %v1086 = vunpack.c.l.b16 %v288
    %v1087 = vunpack.c.h.b16 %v288
    %v1088 = vunpack.c.l.b16 %v289
    %v1089 = vunpack.c.h.b16 %v289
    %v1090 = vunpack.c.l.b16 %v290
    %v1091 = vunpack.c.h.b16 %v290
    %v1092 = vunpack.c.l.b16 %v291
    %v1093 = vunpack.c.h.b16 %v291
    %v1094 = vunpack.c.l.b16 %v292
    %v1095 = vunpack.c.h.b16 %v292
    %v1096 = vunpack.c.l.b16 %v293
    %v1097 = vunpack.c.h.b16 %v293
    %v1098 = vunpack.c.l.b16 %v294
    %v1099 = vunpack.c.h.b16 %v294
    %v1100 = vunpack.c.l.b16 %v295
    %v1101 = vunpack.c.h.b16 %v295
    %v1102 = vunpack.c.l.b16 %v296
    %v1103 = vunpack.c.h.b16 %v296
    %v1104 = vunpack.c.l.b16 %v297
    %v1105 = vunpack.c.h.b16 %v297
    %v1106 = vunpack.c.l.b16 %v298
    %v1107 = vunpack.c.h.b16 %v298
    %v1108 = vunpack.c.l.b16 %v299
    %v1109 = vunpack.c.h.b16 %v299
    %v1110 = vunpack.c.l.b16 %v300
    %v1111 = vunpack.c.h.b16 %v300
    %v1112 = vunpack.c.l.b16 %v301
    %v1113 = vunpack.c.h.b16 %v301
    %v1114 = vunpack.c.l.b16 %v302
    %v1115 = vunpack.c.h.b16 %v302
    %v1116 = vunpack.c.l.b16 %v303
    %v1117 = vunpack.c.h.b16 %v303
    %v1118 = vunpack.c.l.b16 %v304
    %v1119 = vunpack.c.h.b16 %v304
    %v1120 = vunpack.c.l.b16 %v305
    %v1121 = vunpack.c.h.b16 %v305
    %v1122 = vunpack.c.l.b16 %v306
    %v1123 = vunpack.c.h.b16 %v306
    %v1124 = vunpack.c.l.b16 %v307
    %v1125 = vunpack.c.h.b16 %v307
    %v1126 = vunpack.c.l.b16 %v308
    %v1127 = vunpack.c.h.b16 %v308
    %v1128 = vunpack.c.l.b16 %v309
    %v1129 = vunpack.c.h.b16 %v309
    %v1130 = vunpack.c.l.b16 %v310
    %v1131 = vunpack.c.h.b16 %v310
    %v1132 = vunpack.c.l.b16 %v311
    %v1133 = vunpack.c.h.b16 %v311
    %v1134 = vunpack.c.l.b16 %v312
    %v1135 = vunpack.c.h.b16 %v312
    %v1136 = vunpack.c.l.b16 %v313
    %v1137 = vunpack.c.h.b16 %v313
    %v1138 = vunpack.c.l.b16 %v314
    %v1139 = vunpack.c.h.b16 %v314
    %v1140 = vunpack.c.l.b16 %v315
    %v1141 = vunpack.c.h.b16 %v315
    %v1142 = vunpack.c.l.b16 %v316
    %v1143 = vunpack.c.h.b16 %v316
    %v1144 = vunpack.c.l.b16 %v317
    %v1145 = vunpack.c.h.b16 %v317
    %v1146 = vunpack.c.l.b16 %v318
    %v1147 = vunpack.c.h.b16 %v318
    %v1148 = vunpack.c.l.b16 %v319
    %v1149 = vunpack.c.h.b16 %v319
    %v1150 = vunpack.c.l.b16 %v320
    %v1151 = vunpack.c.h.b16 %v320
    %v1152 = vunpack.c.l.b16 %v321
    %v1153 = vunpack.c.h.b16 %v321
    %v1154 = vunpack.c.l.b16 %v322
    %v1155 = vunpack.c.h.b16 %v322
    %v1156 = vunpack.c.l.b16 %v323
    %v1157 = vunpack.c.h.b16 %v323
    %v1158 = vunpack.c.l.b16 %v324
    %v1159 = vunpack.c.h.b16 %v324
    %v1160 = vunpack.c.l.b16 %v325
    %v1161 = vunpack.c.h.b16 %v325
    %v1162 = vunpack.c.l.b16 %v326
    %v1163 = vunpack.c.h.b16 %v326
    %v1164 = vunpack.c.l.b16 %v327
    %v1165 = vunpack.c.h.b16 %v327
    %v1166 = vunpack.c.l.b16 %v328
    %v1167 = vunpack.c.h.b16 %v328
    %v1168 = vunpack.c.l.b16 %v329
    %v1169 = vunpack.c.h.b16 %v329
    %v1170 = vunpack.c.l.b16 %v330
    %v1171 = vunpack.c.h.b16 %v330
    %v1172 = vunpack.c.l.b16 %v331
    %v1173 = vunpack.c.h.b16 %v331
    %v1174 = vunpack.c.l.b16 %v332
    %v1175 = vunpack.c.h.b16 %v332
    %v1176 = vunpack.c.l.b16 %v333
    %v1177 = vunpack.c.h.b16 %v333
    %v1178 = vunpack.c.l.b16 %v334
    %v1179 = vunpack.c.h.b16 %v334
    %v1180 = vunpack.c.l.b16 %v335
    %v1181 = vunpack.c.h.b16 %v335
    %v1182 = vunpack.c.l.b16 %v336
    %v1183 = vunpack.c.h.b16 %v336
    %v1184 = vunpack.c.l.b16 %v337
    %v1185 = vunpack.c.h.b16 %v337
    %v1186 = vunpack.c.l.b16 %v338
    %v1187 = vunpack.c.h.b16 %v338
    %v1188 = vunpack.c.l.b16 %v339
    %v1189 = vunpack.c.h.b16 %v339
    %v1190 = vunpack.c.l.b16 %v340
    %v1191 = vunpack.c.h.b16 %v340
    %v1192 = vunpack.c.l.b16 %v341
    %v1193 = vunpack.c.h.b16 %v341
    %v1194 = vunpack.c.l.b16 %v342
    %v1195 = vunpack.c.h.b16 %v342
    %v1196 = vunpack.c.l.b16 %v343
    %v1197 = vunpack.c.h.b16 %v343
    %v1198 = vunpack.c.l.b16 %v344
    %v1199 = vunpack.c.h.b16 %v344
    %v1200 = vunpack.c.l.b16 %v345
    %v1201 = vunpack.c.h.b16 %v345
    %v1202 = vunpack.c.l.b16 %v346
    %v1203 = vunpack.c.h.b16 %v346
    %v1204 = vunpack.c.l.b16 %v347
    %v1205 = vunpack.c.h.b16 %v347
    %v1206 = vunpack.c.l.b16 %v348
    %v1207 = vunpack.c.h.b16 %v348
    %v1208 = vunpack.c.l.b16 %v349
    %v1209 = vunpack.c.h.b16 %v349
    %v1210 = vunpack.c.l.b16 %v350
    %v1211 = vunpack.c.h.b16 %v350
    %v1212 = vunpack.c.l.b16 %v351
    %v1213 = vunpack.c.h.b16 %v351
    %v1214 = vunpack.c.l.b16 %v352
    %v1215 = vunpack.c.h.b16 %v352
    %v1216 = vunpack.c.l.b16 %v353
    %v1217 = vunpack.c.h.b16 %v353
    %v1218 = vunpack.c.l.b16 %v354
    %v1219 = vunpack.c.h.b16 %v354
    %v1220 = vunpack.c.l.b16 %v355
    %v1221 = vunpack.c.h.b16 %v355
    %v1222 = vunpack.c.l.b16 %v356
    %v1223 = vunpack.c.h.b16 %v356
    %v1224 = vunpack.c.l.b16 %v357
    %v1225 = vunpack.c.h.b16 %v357
    %v1226 = vunpack.c.l.b16 %v358
    %v1227 = vunpack.c.h.b16 %v358
    %v1228 = vunpack.c.l.b16 %v359
    %v1229 = vunpack.c.h.b16 %v359
    %v1230 = vunpack.c.l.b16 %v360
    %v1231 = vunpack.c.h.b16 %v360
    %v1232 = vunpack.c.l.b16 %v361
    %v1233 = vunpack.c.h.b16 %v361
    %v1234 = vunpack.c.l.b16 %v362
    %v1235 = vunpack.c.h.b16 %v362
    %v1236 = vunpack.c.l.b16 %v363
    %v1237 = vunpack.c.h.b16 %v363
    %v1238 = vunpack.c.l.b16 %v364
    %v1239 = vunpack.c.h.b16 %v364
    %v1240 = vunpack.c.l.b16 %v365
    %v1241 = vunpack.c.h.b16 %v365
    %v1242 = vunpack.c.l.b16 %v366
    %v1243 = vunpack.c.h.b16 %v366
    %v1244 = vunpack.c.l.b16 %v367
    %v1245 = vunpack.c.h.b16 %v367
    %v1246 = vunpack.c.l.b16 %v368
    %v1247 = vunpack.c.h.b16 %v368
    %v1248 = vunpack.c.l.b16 %v369
    %v1249 = vunpack.c.h.b16 %v369
    %v1250 = vunpack.c.l.b16 %v370
    %v1251 = vunpack.c.h.b16 %v370
    %v1252 = vunpack.c.l.b16 %v371
    %v1253 = vunpack.c.h.b16 %v371
    %v1254 = vunpack.c.l.b16 %v372
    %v1255 = vunpack.c.h.b16 %v372
    %v1256 = vunpack.c.l.b16 %v373
    %v1257 = vunpack.c.h.b16 %v373
    %v1258 = vunpack.c.l.b16 %v374
    %v1259 = vunpack.c.h.b16 %v374
    %v1260 = vunpack.c.l.b16 %v375
    %v1261 = vunpack.c.h.b16 %v375
    %v1262 = vunpack.c.l.b16 %v376
    %v1263 = vunpack.c.h.b16 %v376
    %v1264 = vunpack.c.l.b16 %v377
    %v1265 = vunpack.c.h.b16 %v377
    %v1266 = vunpack.c.l.b16 %v378
    %v1267 = vunpack.c.h.b16 %v378
    %v1268 = vunpack.c.l.b16 %v379
    %v1269 = vunpack.c.h.b16 %v379
    %v1270 = vunpack.c.l.b16 %v380
    %v1271 = vunpack.c.h.b16 %v380
    %v1272 = vunpack.c.l.b16 %v381
    %v1273 = vunpack.c.h.b16 %v381
    %v1274 = vunpack.c.l.b16 %v382
    %v1275 = vunpack.c.h.b16 %v382
    %v1276 = vunpack.c.l.b16 %v383
    %v1277 = vunpack.c.h.b16 %v383
    %v1278 = vunpack.c.l.b16 %v384
    %v1279 = vunpack.c.h.b16 %v384
    %v1280 = vunpack.c.l.b16 %v385
    %v1281 = vunpack.c.h.b16 %v385
    %v1282 = vunpack.c.l.b16 %v386
    %v1283 = vunpack.c.h.b16 %v386
    %v1284 = vunpack.c.l.b16 %v387
    %v1285 = vunpack.c.h.b16 %v387
    %v1286 = vunpack.c.l.b16 %v388
    %v1287 = vunpack.c.h.b16 %v388
    %v1288 = vunpack.c.l.b16 %v389
    %v1289 = vunpack.c.h.b16 %v389
    %v1290 = vunpack.c.l.b16 %v390
    %v1291 = vunpack.c.h.b16 %v390
    %v1292 = vunpack.c.l.b16 %v391
    %v1293 = vunpack.c.h.b16 %v391
    %v1294 = vunpack.c.l.b16 %v392
    %v1295 = vunpack.c.h.b16 %v392
    %v1296 = vunpack.c.l.b16 %v393
    %v1297 = vunpack.c.h.b16 %v393
    %v1298 = vunpack.c.l.b16 %v394
    %v1299 = vunpack.c.h.b16 %v394
    %v1300 = vunpack.c.l.b16 %v395
    %v1301 = vunpack.c.h.b16 %v395
    %v1302 = vunpack.c.l.b16 %v396
    %v1303 = vunpack.c.h.b16 %v396
    %v1304 = vunpack.c.l.b16 %v397
    %v1305 = vunpack.c.h.b16 %v397
    %v1306 = vunpack.c.l.b16 %v398
    %v1307 = vunpack.c.h.b16 %v398
    %v1308 = vunpack.c.l.b16 %v399
    %v1309 = vunpack.c.h.b16 %v399
    %v1310 = vunpack.c.l.b16 %v400
    %v1311 = vunpack.c.h.b16 %v400
    %v1312 = vunpack.c.l.b16 %v401
    %v1313 = vunpack.c.h.b16 %v401
    %v1314 = vunpack.c.l.b16 %v402
    %v1315 = vunpack.c.h.b16 %v402
    %v1316 = vunpack.c.l.b16 %v403
    %v1317 = vunpack.c.h.b16 %v403
    %v1318 = vunpack.c.l.b16 %v404
    %v1319 = vunpack.c.h.b16 %v404
    %v1320 = vunpack.c.l.b16 %v405
    %v1321 = vunpack.c.h.b16 %v405
    %v1322 = vunpack.c.l.b16 %v406
    %v1323 = vunpack.c.h.b16 %v406
    %v1324 = vunpack.c.l.b16 %v407
    %v1325 = vunpack.c.h.b16 %v407
    %v1326 = vunpack.c.l.b16 %v408
    %v1327 = vunpack.c.h.b16 %v408
    %v1328 = vunpack.c.l.b16 %v409
    %v1329 = vunpack.c.h.b16 %v409
    %v1330 = vunpack.c.l.b16 %v410
    %v1331 = vunpack.c.h.b16 %v410
    %v1332 = vunpack.c.l.b16 %v411
    %v1333 = vunpack.c.h.b16 %v411
    %v1334 = vunpack.c.l.b16 %v412
    %v1335 = vunpack.c.h.b16 %v412
    %v1336 = vunpack.c.l.b16 %v413
    %v1337 = vunpack.c.h.b16 %v413
    %v1338 = vunpack.c.l.b16 %v414
    %v1339 = vunpack.c.h.b16 %v414
    %v1340 = vunpack.c.l.b16 %v415
    %v1341 = vunpack.c.h.b16 %v415
    %v1342 = vunpack.c.l.b16 %v416
    %v1343 = vunpack.c.h.b16 %v416
    %v1344 = vunpack.c.l.b16 %v417
    %v1345 = vunpack.c.h.b16 %v417
    %v1346 = vunpack.c.l.b16 %v418
    %v1347 = vunpack.c.h.b16 %v418
    %v1348 = vunpack.c.l.b16 %v419
    %v1349 = vunpack.c.h.b16 %v419
    %v1350 = vunpack.c.l.b16 %v420
    %v1351 = vunpack.c.h.b16 %v420
    %v1352 = vunpack.c.l.b16 %v421
    %v1353 = vunpack.c.h.b16 %v421
    %v1354 = vunpack.c.l.b16 %v422
    %v1355 = vunpack.c.h.b16 %v422
    %v1356 = vunpack.c.l.b16 %v423
    %v1357 = vunpack.c.h.b16 %v423
    %v1358 = vunpack.c.l.b16 %v424
    %v1359 = vunpack.c.h.b16 %v424
    %v1360 = vunpack.c.l.b16 %v425
    %v1361 = vunpack.c.h.b16 %v425
    %v1362 = vunpack.c.l.b16 %v426
    %v1363 = vunpack.c.h.b16 %v426
    %v1364 = vunpack.c.l.b16 %v427
    %v1365 = vunpack.c.h.b16 %v427
    %v1366 = vunpack.c.l.b16 %v428
    %v1367 = vunpack.c.h.b16 %v428
    %v1368 = vunpack.c.l.b16 %v429
    %v1369 = vunpack.c.h.b16 %v429
    %v1370 = vunpack.c.l.b16 %v430
    %v1371 = vunpack.c.h.b16 %v430
    %v1372 = vunpack.c.l.b16 %v431
    %v1373 = vunpack.c.h.b16 %v431
    %v1374 = vpack.c.b16 %v782, %v774
    %v1375 = vpack.c.b16 %v783, %v775
    %v1376 = vpack.c.b16 %v784, %v776
    %v1377 = vpack.c.b16 %v785, %v777
    %v1378 = vpack.c.b16 %v786, %v778
    %v1379 = vpack.c.b16 %v787, %v779
    %v1380 = vpack.c.b16 %v788, %v780
    %v1381 = vpack.c.b16 %v789, %v781
    %v1382 = vpack.c.b16 %v798, %v790
    %v1383 = vpack.c.b16 %v799, %v791
    %v1384 = vpack.c.b16 %v800, %v792
    %v1385 = vpack.c.b16 %v801, %v793
    %v1386 = vpack.c.b16 %v802, %v794
    %v1387 = vpack.c.b16 %v803, %v795
    %v1388 = vpack.c.b16 %v804, %v796
    %v1389 = vpack.c.b16 %v805, %v797
    %v1390 = vpack.c.b16 %v814, %v806
    %v1391 = vpack.c.b16 %v815, %v807
    %v1392 = vpack.c.b16 %v816, %v808
    %v1393 = vpack.c.b16 %v817, %v809
    %v1394 = vpack.c.b16 %v818, %v810
    %v1395 = vpack.c.b16 %v819, %v811
    %v1396 = vpack.c.b16 %v820, %v812
    %v1397 = vpack.c.b16 %v821, %v813
    %v1398 = vpack.c.b16 %v830, %v822
    %v1399 = vpack.c.b16 %v831, %v823
    %v1400 = vpack.c.b16 %v832, %v824
    %v1401 = vpack.c.b16 %v833, %v825
    %v1402 = vpack.c.b16 %v834, %v826
    %v1403 = vpack.c.b16 %v835, %v827
    %v1404 = vpack.c.b16 %v836, %v828
    %v1405 = vpack.c.b16 %v837, %v829
    %v1406 = vpack.c.b16 %v846, %v838
    %v1407 = vpack.c.b16 %v847, %v839
    %v1408 = vpack.c.b16 %v848, %v840
    %v1409 = vpack.c.b16 %v849, %v841
    %v1410 = vpack.c.b16 %v850, %v842
    %v1411 = vpack.c.b16 %v851, %v843
    %v1412 = vpack.c.b16 %v852, %v844
    %v1413 = vpack.c.b16 %v853, %v845
    %v1414 = vpack.c.b16 %v862, %v854
    %v1415 = vpack.c.b16 %v863, %v855
    %v1416 = vpack.c.b16 %v864, %v856
    %v1417 = vpack.c.b16 %v865, %v857
    %v1418 = vpack.c.b16 %v866, %v858
    %v1419 = vpack.c.b16 %v867, %v859
    %v1420 = vpack.c.b16 %v868, %v860
    %v1421 = vpack.c.b16 %v869, %v861
    %v1422 = vpack.c.b16 %v878, %v870
    %v1423 = vpack.c.b16 %v879, %v871
    %v1424 = vpack.c.b16 %v880, %v872
    %v1425 = vpack.c.b16 %v881, %v873
    %v1426 = vpack.c.b16 %v882, %v874
    %v1427 = vpack.c.b16 %v883, %v875
    %v1428 = vpack.c.b16 %v884, %v876
    %v1429 = vpack.c.b16 %v885, %v877
    %v1430 = vpack.c.b16 %v894, %v886
    %v1431 = vpack.c.b16 %v895, %v887
    %v1432 = vpack.c.b16 %v896, %v888
    %v1433 = vpack.c.b16 %v897, %v889
    %v1434 = vpack.c.b16 %v898, %v890
    %v1435 = vpack.c.b16 %v899, %v891
    %v1436 = vpack.c.b16 %v900, %v892
    %v1437 = vpack.c.b16 %v901, %v893
    %v1438 = vpack.c.b16 %v910, %v902
    %v1439 = vpack.c.b16 %v911, %v903
    %v1440 = vpack.c.b16 %v912, %v904
    %v1441 = vpack.c.b16 %v913, %v905
    %v1442 = vpack.c.b16 %v914, %v906
    %v1443 = vpack.c.b16 %v915, %v907
    %v1444 = vpack.c.b16 %v916, %v908
    %v1445 = vpack.c.b16 %v917, %v909
    %v1446 = vpack.c.b16 %v926, %v918
    %v1447 = vpack.c.b16 %v927, %v919
    %v1448 = vpack.c.b16 %v928, %v920
    %v1449 = vpack.c.b16 %v929, %v921
    %v1450 = vpack.c.b16 %v930, %v922
    %v1451 = vpack.c.b16 %v931, %v923
    %v1452 = vpack.c.b16 %v932, %v924
    %v1453 = vpack.c.b16 %v933, %v925
    %v1454 = vpack.c.b16 %v942, %v934
    %v1455 = vpack.c.b16 %v943, %v935
    %v1456 = vpack.c.b16 %v944, %v936
    %v1457 = vpack.c.b16 %v945, %v937
    %v1458 = vpack.c.b16 %v946, %v938
    %v1459 = vpack.c.b16 %v947, %v939
    %v1460 = vpack.c.b16 %v948, %v940
    %v1461 = vpack.c.b16 %v949, %v941
    %v1462 = vpack.c.b16 %v958, %v950
    %v1463 = vpack.c.b16 %v959, %v951
    %v1464 = vpack.c.b16 %v960, %v952
    %v1465 = vpack.c.b16 %v961, %v953
    %v1466 = vpack.c.b16 %v962, %v954
    %v1467 = vpack.c.b16 %v963, %v955
    %v1468 = vpack.c.b16 %v964, %v956
    %v1469 = vpack.c.b16 %v965, %v957
    %v1470 = vpack.c.b16 %v974, %v966
    %v1471 = vpack.c.b16 %v975, %v967
    %v1472 = vpack.c.b16 %v976, %v968
    %v1473 = vpack.c.b16 %v977, %v969
    %v1474 = vpack.c.b16 %v978, %v970
    %v1475 = vpack.c.b16 %v979, %v971
    %v1476 = vpack.c.b16 %v980, %v972
    %v1477 = vpack.c.b16 %v981, %v973
    %v1478 = vpack.c.b16 %v990, %v982
    %v1479 = vpack.c.b16 %v991, %v983
    %v1480 = vpack.c.b16 %v992, %v984
    %v1481 = vpack.c.b16 %v993, %v985
    %v1482 = vpack.c.b16 %v994, %v986
    %v1483 = vpack.c.b16 %v995, %v987
    %v1484 = vpack.c.b16 %v996, %v988
    %v1485 = vpack.c.b16 %v997, %v989
    %v1486 = vpack.c.b16 %v1006, %v998
    %v1487 = vpack.c.b16 %v1007, %v999
    %v1488 = vpack.c.b16 %v1008, %v1000
    %v1489 = vpack.c.b16 %v1009, %v1001
    %v1490 = vpack.c.b16 %v1010, %v1002
    %v1491 = vpack.c.b16 %v1011, %v1003
    %v1492 = vpack.c.b16 %v1012, %v1004
    %v1493 = vpack.c.b16 %v1013, %v1005
    %v1494 = vpack.c.b16 %v1022, %v1014
    %v1495 = vpack.c.b16 %v1023, %v1015
    %v1496 = vpack.c.b16 %v1024, %v1016
    %v1497 = vpack.c.b16 %v1025, %v1017
    %v1498 = vpack.c.b16 %v1026, %v1018
    %v1499 = vpack.c.b16 %v1027, %v1019
    %v1500 = vpack.c.b16 %v1028, %v1020
    %v1501 = vpack.c.b16 %v1029, %v1021
    %v1502 = vpack.c.b16 %v1038, %v1030
    %v1503 = vpack.c.b16 %v1039, %v1031
    %v1504 = vpack.c.b16 %v1040, %v1032
    %v1505 = vpack.c.b16 %v1041, %v1033
    %v1506 = vpack.c.b16 %v1042, %v1034
    %v1507 = vpack.c.b16 %v1043, %v1035
    %v1508 = vpack.c.b16 %v1044, %v1036
    %v1509 = vpack.c.b16 %v1045, %v1037
    %v1510 = vpack.c.b16 %v1054, %v1046
    %v1511 = vpack.c.b16 %v1055, %v1047
    %v1512 = vpack.c.b16 %v1056, %v1048
    %v1513 = vpack.c.b16 %v1057, %v1049
    %v1514 = vpack.c.b16 %v1058, %v1050
    %v1515 = vpack.c.b16 %v1059, %v1051
    %v1516 = vpack.c.b16 %v1060, %v1052
    %v1517 = vpack.c.b16 %v1061, %v1053
    %v1518 = vpack.c.b16 %v1070, %v1062
    %v1519 = vpack.c.b16 %v1071, %v1063
    %v1520 = vpack.c.b16 %v1072, %v1064
    %v1521 = vpack.c.b16 %v1073, %v1065
    %v1522 = vpack.c.b16 %v1074, %v1066
    %v1523 = vpack.c.b16 %v1075, %v1067
    %v1524 = vpack.c.b16 %v1076, %v1068
    %v1525 = vpack.c.b16 %v1077, %v1069
    %v1526 = vpack.c.b16 %v1086, %v1078
    %v1527 = vpack.c.b16 %v1087, %v1079
    %v1528 = vpack.c.b16 %v1088, %v1080
    %v1529 = vpack.c.b16 %v1089, %v1081
    %v1530 = vpack.c.b16 %v1090, %v1082
    %v1531 = vpack.c.b16 %v1091, %v1083
    %v1532 = vpack.c.b16 %v1092, %v1084
    %v1533 = vpack.c.b16 %v1093, %v1085
    %v1534 = vpack.c.b16 %v1102, %v1094
    %v1535 = vpack.c.b16 %v1103, %v1095
    %v1536 = vpack.c.b16 %v1104, %v1096
    %v1537 = vpack.c.b16 %v1105, %v1097
    %v1538 = vpack.c.b16 %v1106, %v1098
    %v1539 = vpack.c.b16 %v1107, %v1099
    %v1540 = vpack.c.b16 %v1108, %v1100
    %v1541 = vpack.c.b16 %v1109, %v1101
    %v1542 = vpack.c.b16 %v1118, %v1110
    %v1543 = vpack.c.b16 %v1119, %v1111
    %v1544 = vpack.c.b16 %v1120, %v1112
    %v1545 = vpack.c.b16 %v1121, %v1113
    %v1546 = vpack.c.b16 %v1122, %v1114
    %v1547 = vpack.c.b16 %v1123, %v1115
    %v1548 = vpack.c.b16 %v1124, %v1116
    %v1549 = vpack.c.b16 %v1125, %v1117
    %v1550 = vpack.c.b16 %v1134, %v1126
    %v1551 = vpack.c.b16 %v1135, %v1127
    %v1552 = vpack.c.b16 %v1136, %v1128
    %v1553 = vpack.c.b16 %v1137, %v1129
    %v1554 = vpack.c.b16 %v1138, %v1130
    %v1555 = vpack.c.b16 %v1139, %v1131
    %v1556 = vpack.c.b16 %v1140, %v1132
    %v1557 = vpack.c.b16 %v1141, %v1133
    %v1558 = vpack.c.b16 %v1150, %v1142
    %v1559 = vpack.c.b16 %v1151, %v1143
    %v1560 = vpack.c.b16 %v1152, %v1144
    %v1561 = vpack.c.b16 %v1153, %v1145
    %v1562 = vpack.c.b16 %v1154, %v1146
    %v1563 = vpack.c.b16 %v1155, %v1147
    %v1564 = vpack.c.b16 %v1156, %v1148
    %v1565 = vpack.c.b16 %v1157, %v1149
    %v1566 = vpack.c.b16 %v1166, %v1158
    %v1567 = vpack.c.b16 %v1167, %v1159
    %v1568 = vpack.c.b16 %v1168, %v1160
    %v1569 = vpack.c.b16 %v1169, %v1161
    %v1570 = vpack.c.b16 %v1170, %v1162
    %v1571 = vpack.c.b16 %v1171, %v1163
    %v1572 = vpack.c.b16 %v1172, %v1164
    %v1573 = vpack.c.b16 %v1173, %v1165
    %v1574 = vpack.c.b16 %v1182, %v1174
    %v1575 = vpack.c.b16 %v1183, %v1175
    %v1576 = vpack.c.b16 %v1184, %v1176
    %v1577 = vpack.c.b16 %v1185, %v1177
    %v1578 = vpack.c.b16 %v1186, %v1178
    %v1579 = vpack.c.b16 %v1187, %v1179
    %v1580 = vpack.c.b16 %v1188, %v1180
    %v1581 = vpack.c.b16 %v1189, %v1181
    %v1582 = vpack.c.b16 %v1198, %v1190
    %v1583 = vpack.c.b16 %v1199, %v1191
    %v1584 = vpack.c.b16 %v1200, %v1192
    %v1585 = vpack.c.b16 %v1201, %v1193
    %v1586 = vpack.c.b16 %v1202, %v1194
    %v1587 = vpack.c.b16 %v1203, %v1195
    %v1588 = vpack.c.b16 %v1204, %v1196
    %v1589 = vpack.c.b16 %v1205, %v1197
    %v1590 = vpack.c.b16 %v1214, %v1206
    %v1591 = vpack.c.b16 %v1215, %v1207
    %v1592 = vpack.c.b16 %v1216, %v1208
    %v1593 = vpack.c.b16 %v1217, %v1209
    %v1594 = vpack.c.b16 %v1218, %v1210
    %v1595 = vpack.c.b16 %v1219, %v1211
    %v1596 = vpack.c.b16 %v1220, %v1212
    %v1597 = vpack.c.b16 %v1221, %v1213
    %v1598 = vpack.c.b16 %v1230, %v1222
    %v1599 = vpack.c.b16 %v1231, %v1223
    %v1600 = vpack.c.b16 %v1232, %v1224
    %v1601 = vpack.c.b16 %v1233, %v1225
    %v1602 = vpack.c.b16 %v1234, %v1226
    %v1603 = vpack.c.b16 %v1235, %v1227
    %v1604 = vpack.c.b16 %v1236, %v1228
    %v1605 = vpack.c.b16 %v1237, %v1229
    %v1606 = vpack.c.b16 %v1246, %v1238
    %v1607 = vpack.c.b16 %v1247, %v1239
    %v1608 = vpack.c.b16 %v1248, %v1240
    %v1609 = vpack.c.b16 %v1249, %v1241
    %v1610 = vpack.c.b16 %v1250, %v1242
    %v1611 = vpack.c.b16 %v1251, %v1243
    %v1612 = vpack.c.b16 %v1252, %v1244
    %v1613 = vpack.c.b16 %v1253, %v1245
    %v1614 = vpack.c.b16 %v1262, %v1254
    %v1615 = vpack.c.b16 %v1263, %v1255
    %v1616 = vpack.c.b16 %v1264, %v1256
    %v1617 = vpack.c.b16 %v1265, %v1257
    %v1618 = vpack.c.b16 %v1266, %v1258
    %v1619 = vpack.c.b16 %v1267, %v1259
    %v1620 = vpack.c.b16 %v1268, %v1260
    %v1621 = vpack.c.b16 %v1269, %v1261
    %v1622 = vpack.c.b16 %v1278, %v1270
    %v1623 = vpack.c.b16 %v1279, %v1271
    %v1624 = vpack.c.b16 %v1280, %v1272
    %v1625 = vpack.c.b16 %v1281, %v1273
    %v1626 = vpack.c.b16 %v1282, %v1274
    %v1627 = vpack.c.b16 %v1283, %v1275
    %v1628 = vpack.c.b16 %v1284, %v1276
    %v1629 = vpack.c.b16 %v1285, %v1277
    %v1630 = vpack.c.b16 %v1294, %v1286
    %v1631 = vpack.c.b16 %v1295, %v1287
    %v1632 = vpack.c.b16 %v1296, %v1288
    %v1633 = vpack.c.b16 %v1297, %v1289
    %v1634 = vpack.c.b16 %v1298, %v1290
    %v1635 = vpack.c.b16 %v1299, %v1291
    %v1636 = vpack.c.b16 %v1300, %v1292
    %v1637 = vpack.c.b16 %v1301, %v1293
    %v1638 = vpack.c.b16 %v1310, %v1302
    %v1639 = vpack.c.b16 %v1311, %v1303
    %v1640 = vpack.c.b16 %v1312, %v1304
    %v1641 = vpack.c.b16 %v1313, %v1305
    %v1642 = vpack.c.b16 %v1314, %v1306
    %v1643 = vpack.c.b16 %v1315, %v1307
    %v1644 = vpack.c.b16 %v1316, %v1308
    %v1645 = vpack.c.b16 %v1317, %v1309
    %v1646 = vpack.c.b16 %v1326, %v1318
    %v1647 = vpack.c.b16 %v1327, %v1319
    %v1648 = vpack.c.b16 %v1328, %v1320
    %v1649 = vpack.c.b16 %v1329, %v1321
    %v1650 = vpack.c.b16 %v1330, %v1322
    %v1651 = vpack.c.b16 %v1331, %v1323
    %v1652 = vpack.c.b16 %v1332, %v1324
    %v1653 = vpack.c.b16 %v1333, %v1325
    %v1654 = vpack.c.b16 %v1342, %v1334
    %v1655 = vpack.c.b16 %v1343, %v1335
    %v1656 = vpack.c.b16 %v1344, %v1336
    %v1657 = vpack.c.b16 %v1345, %v1337
    %v1658 = vpack.c.b16 %v1346, %v1338
    %v1659 = vpack.c.b16 %v1347, %v1339
    %v1660 = vpack.c.b16 %v1348, %v1340
    %v1661 = vpack.c.b16 %v1349, %v1341
    %v1662 = vpack.c.b16 %v1358, %v1350
    %v1663 = vpack.c.b16 %v1359, %v1351
    %v1664 = vpack.c.b16 %v1360, %v1352
    %v1665 = vpack.c.b16 %v1361, %v1353
    %v1666 = vpack.c.b16 %v1362, %v1354
    %v1667 = vpack.c.b16 %v1363, %v1355
    %v1668 = vpack.c.b16 %v1364, %v1356
    %v1669 = vpack.c.b16 %v1365, %v1357
    %v1670 = vpack.c.b16 %v1366, %v1366
    %v1671 = vpack.c.b16 %v1367, %v1367
    %v1672 = vpack.c.b16 %v1368, %v1368
    %v1673 = vpack.c.b16 %v1369, %v1369
    %v1674 = vpack.c.b16 %v1370, %v1370
    %v1675 = vpack.c.b16 %v1371, %v1371
    %v1676 = vpack.c.b16 %v1372, %v1372
    %v1677 = vpack.c.b16 %v1373, %v1373
    %vm1974 = vcmask 719872
    %v1976 = vsel %vm1974, %v131, 0
    %vm1978 = vcmask 1043456
    %v1980 = vsel %vm1978, %v1670, 0
    %v1983 = vsel %vm1978, %v1671, 0
    %v1986 = vsel %vm1978, %v1672, 0
    %v1989 = vsel %vm1978, %v1673, 0
    %v1992 = vsel %vm1978, %v1674, 0
    %v1995 = vsel %vm1978, %v1675, 0
    %v1998 = vsel %vm1978, %v1676, 0
    %v2001 = vsel %vm1978, %v1677, 0
    %2003 = vmatprep.subr.bf16.mxu0 %v1375
    %2004 = vmatpush1.bf16.msra.mxu0 %v1374
    %2005 = vmatprep.subr.bf16.mxu0 %v1383
    %2006 = vmatpush1.bf16.msra.mxu0 %v1382
    %2007 = vmatprep.subr.bf16.mxu0 %v1391
    %2008 = vmatpush1.bf16.msra.mxu0 %v1390
    %2009 = vmatprep.subr.bf16.mxu0 %v1399
    %2010 = vmatpush1.bf16.msra.mxu0 %v1398
    %2011 = vmatprep.subr.bf16.mxu0 %v1407
    %2012 = vmatpush1.bf16.msra.mxu0 %v1406
    %2013 = vmatprep.subr.bf16.mxu0 %v1415
    %2014 = vmatpush1.bf16.msra.mxu0 %v1414
    %2015 = vmatprep.subr.bf16.mxu0 %v1423
    %2016 = vmatpush1.bf16.msra.mxu0 %v1422
    %2017 = vmatprep.subr.bf16.mxu0 %v1431
    %2018 = vmatpush1.bf16.msra.mxu0 %v1430
    %2019 = vmatprep.subr.bf16.mxu0 %v1439
    %2020 = vmatpush1.bf16.msra.mxu0 %v1438
    %2021 = vmatprep.subr.bf16.mxu0 %v1447
    %2022 = vmatpush1.bf16.msra.mxu0 %v1446
    %2023 = vmatprep.subr.bf16.mxu0 %v1455
    %2024 = vmatpush1.bf16.msra.mxu0 %v1454
    %2025 = vmatprep.subr.bf16.mxu0 %v1463
    %2026 = vmatpush1.bf16.msra.mxu0 %v1462
    %2027 = vmatprep.subr.bf16.mxu0 %v1471
    %2028 = vmatpush1.bf16.msra.mxu0 %v1470
    %2029 = vmatprep.subr.bf16.mxu0 %v1479
    %2030 = vmatpush1.bf16.msra.mxu0 %v1478
    %2031 = vmatprep.subr.bf16.mxu0 %v1487
    %2032 = vmatpush1.bf16.msra.mxu0 %v1486
    %2033 = vmatprep.subr.bf16.mxu0 %v1495
    %2034 = vmatpush1.bf16.msra.mxu0 %v1494
    %2035 = vmatprep.mubr.bf16.mxu0 %v128
    %2036 = vmatmul.mubr.bf16.gmra.mrb[0].mxu0 %v127
    %v2037 = vpop.f32.mrb[0].mxu0
    %v2038 = vadd.f32 %v437, %v2037
    %v2039 = vpop.f32.mrb[0].mxu0
    %v2040 = vadd.f32 %v441, %v2039
    %v2041 = vpop.f32.mrb[0].mxu0
    %v2042 = vadd.f32 %v437, %v2041
    %v2043 = vpop.f32.mrb[0].mxu0
    %v2044 = vadd.f32 %v441, %v2043
    %2045 = vdwg.mxu0
    %2046 = vmatprep.subr.bf16.mxu0 %v1503
    %2047 = vmatpush1.bf16.msra.mxu0 %v1502
    %2048 = vmatprep.subr.bf16.mxu0 %v1511
    %2049 = vmatpush1.bf16.msra.mxu0 %v1510
    %2050 = vmatprep.subr.bf16.mxu0 %v1519
    %2051 = vmatpush1.bf16.msra.mxu0 %v1518
    %2052 = vmatprep.subr.bf16.mxu0 %v1527
    %2053 = vmatpush1.bf16.msra.mxu0 %v1526
    %2054 = vmatprep.subr.bf16.mxu0 %v1535
    %2055 = vmatpush1.bf16.msra.mxu0 %v1534
    %2056 = vmatprep.subr.bf16.mxu0 %v1543
    %2057 = vmatpush1.bf16.msra.mxu0 %v1542
    %2058 = vmatprep.subr.bf16.mxu0 %v1551
    %2059 = vmatpush1.bf16.msra.mxu0 %v1550
    %2060 = vmatprep.subr.bf16.mxu0 %v1559
    %2061 = vmatpush1.bf16.msra.mxu0 %v1558
    %2062 = vmatprep.subr.bf16.mxu0 %v1567
    %2063 = vmatpush1.bf16.msra.mxu0 %v1566
    %2064 = vmatprep.subr.bf16.mxu0 %v1575
    %2065 = vmatpush1.bf16.msra.mxu0 %v1574
    %2066 = vmatprep.subr.bf16.mxu0 %v1583
    %2067 = vmatpush1.bf16.msra.mxu0 %v1582
    %2068 = vmatprep.subr.bf16.mxu0 %v1591
    %2069 = vmatpush1.bf16.msra.mxu0 %v1590
    %2070 = vmatprep.subr.bf16.mxu0 %v1599
    %2071 = vmatpush1.bf16.msra.mxu0 %v1598
    %2072 = vmatprep.subr.bf16.mxu0 %v1607
    %2073 = vmatpush1.bf16.msra.mxu0 %v1606
    %2074 = vmatprep.subr.bf16.mxu0 %v1615
    %2075 = vmatpush1.bf16.msra.mxu0 %v1614
    %2076 = vmatprep.subr.bf16.mxu0 %v1623
    %2077 = vmatpush1.bf16.msra.mxu0 %v1622
    %2078 = vmatprep.mubr.bf16.mxu0 %v130
    %2079 = vmatmul.mubr.bf16.gmra.mrb[0].mxu0 %v129
    %v2080 = vpop.f32.mrb[0].mxu0
    %v2081 = vadd.f32 %v2038, %v2080
    %v2082 = vpop.f32.mrb[0].mxu0
    %v2083 = vadd.f32 %v2040, %v2082
    %v2084 = vpop.f32.mrb[0].mxu0
    %v2085 = vadd.f32 %v2042, %v2084
    %v2086 = vpop.f32.mrb[0].mxu0
    %v2087 = vadd.f32 %v2044, %v2086
    %2088 = vdwg.mxu0
    %2089 = vmatprep.subr.bf16.mxu0 %v1631
    %2090 = vmatpush1.bf16.msra.mxu0 %v1630
    %2091 = vmatprep.subr.bf16.mxu0 %v1639
    %2092 = vmatpush1.bf16.msra.mxu0 %v1638
    %2093 = vmatprep.subr.bf16.mxu0 %v1647
    %2094 = vmatpush1.bf16.msra.mxu0 %v1646
    %2095 = vmatprep.subr.bf16.mxu0 %v1655
    %2096 = vmatpush1.bf16.msra.mxu0 %v1654
    %2097 = vmatprep.subr.bf16.mxu0 %v1663
    %2098 = vmatpush1.bf16.msra.mxu0 %v1662
    %2099 = vmatprep.subr.bf16.mxu0 %v1983
    %2100 = vmatpush1.bf16.msra.mxu0 %v1980
    %2101 = vmatprep.subr.bf16.mxu0 0
    %2102 = vmatpush1.bf16.msra.mxu0 0
    %2103 = vmatprep.subr.bf16.mxu0 0
    %2104 = vmatpush1.bf16.msra.mxu0 0
    %2105 = vmatprep.subr.bf16.mxu0 0
    %2106 = vmatpush1.bf16.msra.mxu0 0
    %2107 = vmatprep.subr.bf16.mxu0 0
    %2108 = vmatpush1.bf16.msra.mxu0 0
    %2109 = vmatprep.subr.bf16.mxu0 0
    %2110 = vmatpush1.bf16.msra.mxu0 0
    %2111 = vmatprep.subr.bf16.mxu0 0
    %2112 = vmatpush1.bf16.msra.mxu0 0
    %2113 = vmatprep.subr.bf16.mxu0 0
    %2114 = vmatpush1.bf16.msra.mxu0 0
    %2115 = vmatprep.subr.bf16.mxu0 0
    %2116 = vmatpush1.bf16.msra.mxu0 0
    %2117 = vmatprep.subr.bf16.mxu0 0
    %2118 = vmatpush1.bf16.msra.mxu0 0
    %2119 = vmatprep.subr.bf16.mxu0 0
    %2120 = vmatpush1.bf16.msra.mxu0 0
    %2121 = vmatprep.mubr.bf16.mxu0 0
    %2122 = vmatmul.mubr.bf16.gmra.mrb[0].mxu0 %v1976
    %v2123 = vpop.f32.mrb[0].mxu0
    %v2124 = vadd.f32 %v2081, %v2123
    %v2125 = vpop.f32.mrb[0].mxu0
    %v2126 = vadd.f32 %v2083, %v2125
    %v2127 = vpop.f32.mrb[0].mxu0
    %v2128 = vadd.f32 %v2085, %v2127
    %v2129 = vpop.f32.mrb[0].mxu0
    %v2130 = vadd.f32 %v2087, %v2129
    %2131 = vdwg.mxu0
    %2132 = vmatprep.subr.bf16.mxu0 %v1377
    %2133 = vmatpush1.bf16.msra.mxu0 %v1376
    %2134 = vmatprep.subr.bf16.mxu0 %v1385
    %2135 = vmatpush1.bf16.msra.mxu0 %v1384
    %2136 = vmatprep.subr.bf16.mxu0 %v1393
    %2137 = vmatpush1.bf16.msra.mxu0 %v1392
    %2138 = vmatprep.subr.bf16.mxu0 %v1401
    %2139 = vmatpush1.bf16.msra.mxu0 %v1400
    %2140 = vmatprep.subr.bf16.mxu0 %v1409
    %2141 = vmatpush1.bf16.msra.mxu0 %v1408
    %2142 = vmatprep.subr.bf16.mxu0 %v1417
    %2143 = vmatpush1.bf16.msra.mxu0 %v1416
    %2144 = vmatprep.subr.bf16.mxu0 %v1425
    %2145 = vmatpush1.bf16.msra.mxu0 %v1424
    %2146 = vmatprep.subr.bf16.mxu0 %v1433
    %2147 = vmatpush1.bf16.msra.mxu0 %v1432
    %2148 = vmatprep.subr.bf16.mxu0 %v1441
    %2149 = vmatpush1.bf16.msra.mxu0 %v1440
    %2150 = vmatprep.subr.bf16.mxu0 %v1449
    %2151 = vmatpush1.bf16.msra.mxu0 %v1448
    %2152 = vmatprep.subr.bf16.mxu0 %v1457
    %2153 = vmatpush1.bf16.msra.mxu0 %v1456
    %2154 = vmatprep.subr.bf16.mxu0 %v1465
    %2155 = vmatpush1.bf16.msra.mxu0 %v1464
    %2156 = vmatprep.subr.bf16.mxu0 %v1473
    %2157 = vmatpush1.bf16.msra.mxu0 %v1472
    %2158 = vmatprep.subr.bf16.mxu0 %v1481
    %2159 = vmatpush1.bf16.msra.mxu0 %v1480
    %2160 = vmatprep.subr.bf16.mxu0 %v1489
    %2161 = vmatpush1.bf16.msra.mxu0 %v1488
    %2162 = vmatprep.subr.bf16.mxu0 %v1497
    %2163 = vmatpush1.bf16.msra.mxu0 %v1496
    %2164 = vmatprep.mubr.bf16.mxu0 %v128
    %2165 = vmatmul.mubr.bf16.gmra.mrb[0].mxu0 %v127
    %v2166 = vpop.f32.mrb[0].mxu0
    %v2167 = vadd.f32 %v445, %v2166
    %v2168 = vpop.f32.mrb[0].mxu0
    %v2169 = vadd.f32 %v449, %v2168
    %v2170 = vpop.f32.mrb[0].mxu0
    %v2171 = vadd.f32 %v445, %v2170
    %v2172 = vpop.f32.mrb[0].mxu0
    %v2173 = vadd.f32 %v449, %v2172
    %2174 = vdwg.mxu0
    %2175 = vmatprep.subr.bf16.mxu0 %v1505
    %2176 = vmatpush1.bf16.msra.mxu0 %v1504
    %2177 = vmatprep.subr.bf16.mxu0 %v1513
    %2178 = vmatpush1.bf16.msra.mxu0 %v1512
    %2179 = vmatprep.subr.bf16.mxu0 %v1521
    %2180 = vmatpush1.bf16.msra.mxu0 %v1520
    %2181 = vmatprep.subr.bf16.mxu0 %v1529
    %2182 = vmatpush1.bf16.msra.mxu0 %v1528
    %2183 = vmatprep.subr.bf16.mxu0 %v1537
    %2184 = vmatpush1.bf16.msra.mxu0 %v1536
    %2185 = vmatprep.subr.bf16.mxu0 %v1545
    %2186 = vmatpush1.bf16.msra.mxu0 %v1544
    %2187 = vmatprep.subr.bf16.mxu0 %v1553
    %2188 = vmatpush1.bf16.msra.mxu0 %v1552
    %2189 = vmatprep.subr.bf16.mxu0 %v1561
    %2190 = vmatpush1.bf16.msra.mxu0 %v1560
    %2191 = vmatprep.subr.bf16.mxu0 %v1569
    %2192 = vmatpush1.bf16.msra.mxu0 %v1568
    %2193 = vmatprep.subr.bf16.mxu0 %v1577
    %2194 = vmatpush1.bf16.msra.mxu0 %v1576
    %2195 = vmatprep.subr.bf16.mxu0 %v1585
    %2196 = vmatpush1.bf16.msra.mxu0 %v1584
    %2197 = vmatprep.subr.bf16.mxu0 %v1593
    %2198 = vmatpush1.bf16.msra.mxu0 %v1592
    %2199 = vmatprep.subr.bf16.mxu0 %v1601
    %2200 = vmatpush1.bf16.msra.mxu0 %v1600
    %2201 = vmatprep.subr.bf16.mxu0 %v1609
    %2202 = vmatpush1.bf16.msra.mxu0 %v1608
    %2203 = vmatprep.subr.bf16.mxu0 %v1617
    %2204 = vmatpush1.bf16.msra.mxu0 %v1616
    %2205 = vmatprep.subr.bf16.mxu0 %v1625
    %2206 = vmatpush1.bf16.msra.mxu0 %v1624
    %2207 = vmatprep.mubr.bf16.mxu0 %v130
    %2208 = vmatmul.mubr.bf16.gmra.mrb[0].mxu0 %v129
    %v2209 = vpop.f32.mrb[0].mxu0
    %v2210 = vadd.f32 %v2167, %v2209
    %v2211 = vpop.f32.mrb[0].mxu0
    %v2212 = vadd.f32 %v2169, %v2211
    %v2213 = vpop.f32.mrb[0].mxu0
    %v2214 = vadd.f32 %v2171, %v2213
    %v2215 = vpop.f32.mrb[0].mxu0
    %v2216 = vadd.f32 %v2173, %v2215
    %2217 = vdwg.mxu0
    %2218 = vmatprep.subr.bf16.mxu0 %v1633
    %2219 = vmatpush1.bf16.msra.mxu0 %v1632
    %2220 = vmatprep.subr.bf16.mxu0 %v1641
    %2221 = vmatpush1.bf16.msra.mxu0 %v1640
    %2222 = vmatprep.subr.bf16.mxu0 %v1649
    %2223 = vmatpush1.bf16.msra.mxu0 %v1648
    %2224 = vmatprep.subr.bf16.mxu0 %v1657
    %2225 = vmatpush1.bf16.msra.mxu0 %v1656
    %2226 = vmatprep.subr.bf16.mxu0 %v1665
    %2227 = vmatpush1.bf16.msra.mxu0 %v1664
    %2228 = vmatprep.subr.bf16.mxu0 %v1989
    %2229 = vmatpush1.bf16.msra.mxu0 %v1986
    %2230 = vmatprep.subr.bf16.mxu0 0
    %2231 = vmatpush1.bf16.msra.mxu0 0
    %2232 = vmatprep.subr.bf16.mxu0 0
    %2233 = vmatpush1.bf16.msra.mxu0 0
    %2234 = vmatprep.subr.bf16.mxu0 0
    %2235 = vmatpush1.bf16.msra.mxu0 0
    %2236 = vmatprep.subr.bf16.mxu0 0
    %2237 = vmatpush1.bf16.msra.mxu0 0
    %2238 = vmatprep.subr.bf16.mxu0 0
    %2239 = vmatpush1.bf16.msra.mxu0 0
    %2240 = vmatprep.subr.bf16.mxu0 0
    %2241 = vmatpush1.bf16.msra.mxu0 0
    %2242 = vmatprep.subr.bf16.mxu0 0
    %2243 = vmatpush1.bf16.msra.mxu0 0
    %2244 = vmatprep.subr.bf16.mxu0 0
    %2245 = vmatpush1.bf16.msra.mxu0 0
    %2246 = vmatprep.subr.bf16.mxu0 0
    %2247 = vmatpush1.bf16.msra.mxu0 0
    %2248 = vmatprep.subr.bf16.mxu0 0
    %2249 = vmatpush1.bf16.msra.mxu0 0
    %2250 = vmatprep.mubr.bf16.mxu0 0
    %2251 = vmatmul.mubr.bf16.gmra.mrb[0].mxu0 %v1976
    %v2252 = vpop.f32.mrb[0].mxu0
    %v2253 = vadd.f32 %v2210, %v2252
    %v2254 = vpop.f32.mrb[0].mxu0
    %v2255 = vadd.f32 %v2212, %v2254
    %v2256 = vpop.f32.mrb[0].mxu0
    %v2257 = vadd.f32 %v2214, %v2256
    %v2258 = vpop.f32.mrb[0].mxu0
    %v2259 = vadd.f32 %v2216, %v2258
    %2260 = vdwg.mxu0
    %2261 = vmatprep.subr.bf16.mxu0 %v1379
    %2262 = vmatpush1.bf16.msra.mxu0 %v1378
    %2263 = vmatprep.subr.bf16.mxu0 %v1387
    %2264 = vmatpush1.bf16.msra.mxu0 %v1386
    %2265 = vmatprep.subr.bf16.mxu0 %v1395
    %2266 = vmatpush1.bf16.msra.mxu0 %v1394
    %2267 = vmatprep.subr.bf16.mxu0 %v1403
    %2268 = vmatpush1.bf16.msra.mxu0 %v1402
    %2269 = vmatprep.subr.bf16.mxu0 %v1411
    %2270 = vmatpush1.bf16.msra.mxu0 %v1410
    %2271 = vmatprep.subr.bf16.mxu0 %v1419
    %2272 = vmatpush1.bf16.msra.mxu0 %v1418
    %2273 = vmatprep.subr.bf16.mxu0 %v1427
    %2274 = vmatpush1.bf16.msra.mxu0 %v1426
    %2275 = vmatprep.subr.bf16.mxu0 %v1435
    %2276 = vmatpush1.bf16.msra.mxu0 %v1434
    %2277 = vmatprep.subr.bf16.mxu0 %v1443
    %2278 = vmatpush1.bf16.msra.mxu0 %v1442
    %2279 = vmatprep.subr.bf16.mxu0 %v1451
    %2280 = vmatpush1.bf16.msra.mxu0 %v1450
    %2281 = vmatprep.subr.bf16.mxu0 %v1459
    %2282 = vmatpush1.bf16.msra.mxu0 %v1458
    %2283 = vmatprep.subr.bf16.mxu0 %v1467
    %2284 = vmatpush1.bf16.msra.mxu0 %v1466
    %2285 = vmatprep.subr.bf16.mxu0 %v1475
    %2286 = vmatpush1.bf16.msra.mxu0 %v1474
    %2287 = vmatprep.subr.bf16.mxu0 %v1483
    %2288 = vmatpush1.bf16.msra.mxu0 %v1482
    %2289 = vmatprep.subr.bf16.mxu0 %v1491
    %2290 = vmatpush1.bf16.msra.mxu0 %v1490
    %2291 = vmatprep.subr.bf16.mxu0 %v1499
    %2292 = vmatpush1.bf16.msra.mxu0 %v1498
    %2293 = vmatprep.mubr.bf16.mxu0 %v128
    %2294 = vmatmul.mubr.bf16.gmra.mrb[0].mxu0 %v127
    %v2295 = vpop.f32.mrb[0].mxu0
    %v2296 = vadd.f32 %v453, %v2295
    %v2297 = vpop.f32.mrb[0].mxu0
    %v2298 = vadd.f32 %v457, %v2297
    %v2299 = vpop.f32.mrb[0].mxu0
    %v2300 = vadd.f32 %v453, %v2299
    %v2301 = vpop.f32.mrb[0].mxu0
    %v2302 = vadd.f32 %v457, %v2301
    %2303 = vdwg.mxu0
    %2304 = vmatprep.subr.bf16.mxu0 %v1507
    %2305 = vmatpush1.bf16.msra.mxu0 %v1506
    %2306 = vmatprep.subr.bf16.mxu0 %v1515
    %2307 = vmatpush1.bf16.msra.mxu0 %v1514
    %2308 = vmatprep.subr.bf16.mxu0 %v1523
    %2309 = vmatpush1.bf16.msra.mxu0 %v1522
    %2310 = vmatprep.subr.bf16.mxu0 %v1531
    %2311 = vmatpush1.bf16.msra.mxu0 %v1530
    %2312 = vmatprep.subr.bf16.mxu0 %v1539
    %2313 = vmatpush1.bf16.msra.mxu0 %v1538
    %2314 = vmatprep.subr.bf16.mxu0 %v1547
    %2315 = vmatpush1.bf16.msra.mxu0 %v1546
    %2316 = vmatprep.subr.bf16.mxu0 %v1555
    %2317 = vmatpush1.bf16.msra.mxu0 %v1554
    %2318 = vmatprep.subr.bf16.mxu0 %v1563
    %2319 = vmatpush1.bf16.msra.mxu0 %v1562
    %2320 = vmatprep.subr.bf16.mxu0 %v1571
    %2321 = vmatpush1.bf16.msra.mxu0 %v1570
    %2322 = vmatprep.subr.bf16.mxu0 %v1579
    %2323 = vmatpush1.bf16.msra.mxu0 %v1578
    %2324 = vmatprep.subr.bf16.mxu0 %v1587
    %2325 = vmatpush1.bf16.msra.mxu0 %v1586
    %2326 = vmatprep.subr.bf16.mxu0 %v1595
    %2327 = vmatpush1.bf16.msra.mxu0 %v1594
    %2328 = vmatprep.subr.bf16.mxu0 %v1603
    %2329 = vmatpush1.bf16.msra.mxu0 %v1602
    %2330 = vmatprep.subr.bf16.mxu0 %v1611
    %2331 = vmatpush1.bf16.msra.mxu0 %v1610
    %2332 = vmatprep.subr.bf16.mxu0 %v1619
    %2333 = vmatpush1.bf16.msra.mxu0 %v1618
    %2334 = vmatprep.subr.bf16.mxu0 %v1627
    %2335 = vmatpush1.bf16.msra.mxu0 %v1626
    %2336 = vmatprep.mubr.bf16.mxu0 %v130
    %2337 = vmatmul.mubr.bf16.gmra.mrb[0].mxu0 %v129
    %v2338 = vpop.f32.mrb[0].mxu0
    %v2339 = vadd.f32 %v2296, %v2338
    %v2340 = vpop.f32.mrb[0].mxu0
    %v2341 = vadd.f32 %v2298, %v2340
    %v2342 = vpop.f32.mrb[0].mxu0
    %v2343 = vadd.f32 %v2300, %v2342
    %v2344 = vpop.f32.mrb[0].mxu0
    %v2345 = vadd.f32 %v2302, %v2344
    %2346 = vdwg.mxu0
    %2347 = vmatprep.subr.bf16.mxu0 %v1635
    %2348 = vmatpush1.bf16.msra.mxu0 %v1634
    %2349 = vmatprep.subr.bf16.mxu0 %v1643
    %2350 = vmatpush1.bf16.msra.mxu0 %v1642
    %2351 = vmatprep.subr.bf16.mxu0 %v1651
    %2352 = vmatpush1.bf16.msra.mxu0 %v1650
    %2353 = vmatprep.subr.bf16.mxu0 %v1659
    %2354 = vmatpush1.bf16.msra.mxu0 %v1658
    %2355 = vmatprep.subr.bf16.mxu0 %v1667
    %2356 = vmatpush1.bf16.msra.mxu0 %v1666
    %2357 = vmatprep.subr.bf16.mxu0 %v1995
    %2358 = vmatpush1.bf16.msra.mxu0 %v1992
    %2359 = vmatprep.subr.bf16.mxu0 0
    %2360 = vmatpush1.bf16.msra.mxu0 0
    %2361 = vmatprep.subr.bf16.mxu0 0
    %2362 = vmatpush1.bf16.msra.mxu0 0
    %2363 = vmatprep.subr.bf16.mxu0 0
    %2364 = vmatpush1.bf16.msra.mxu0 0
    %2365 = vmatprep.subr.bf16.mxu0 0
    %2366 = vmatpush1.bf16.msra.mxu0 0
    %2367 = vmatprep.subr.bf16.mxu0 0
    %2368 = vmatpush1.bf16.msra.mxu0 0
    %2369 = vmatprep.subr.bf16.mxu0 0
    %2370 = vmatpush1.bf16.msra.mxu0 0
    %2371 = vmatprep.subr.bf16.mxu0 0
    %2372 = vmatpush1.bf16.msra.mxu0 0
    %2373 = vmatprep.subr.bf16.mxu0 0
    %2374 = vmatpush1.bf16.msra.mxu0 0
    %2375 = vmatprep.subr.bf16.mxu0 0
    %2376 = vmatpush1.bf16.msra.mxu0 0
    %2377 = vmatprep.subr.bf16.mxu0 0
    %2378 = vmatpush1.bf16.msra.mxu0 0
    %2379 = vmatprep.mubr.bf16.mxu0 0
    %2380 = vmatmul.mubr.bf16.gmra.mrb[0].mxu0 %v1976
    %v2381 = vpop.f32.mrb[0].mxu0
    %v2382 = vadd.f32 %v2339, %v2381
    %v2383 = vpop.f32.mrb[0].mxu0
    %v2384 = vadd.f32 %v2341, %v2383
    %v2385 = vpop.f32.mrb[0].mxu0
    %v2386 = vadd.f32 %v2343, %v2385
    %v2387 = vpop.f32.mrb[0].mxu0
    %v2388 = vadd.f32 %v2345, %v2387
    %2389 = vdwg.mxu0
    %2390 = vmatprep.subr.bf16.mxu0 %v1381
    %2391 = vmatpush1.bf16.msra.mxu0 %v1380
    %2392 = vmatprep.subr.bf16.mxu0 %v1389
    %2393 = vmatpush1.bf16.msra.mxu0 %v1388
    %2394 = vmatprep.subr.bf16.mxu0 %v1397
    %2395 = vmatpush1.bf16.msra.mxu0 %v1396
    %2396 = vmatprep.subr.bf16.mxu0 %v1405
    %2397 = vmatpush1.bf16.msra.mxu0 %v1404
    %2398 = vmatprep.subr.bf16.mxu0 %v1413
    %2399 = vmatpush1.bf16.msra.mxu0 %v1412
    %2400 = vmatprep.subr.bf16.mxu0 %v1421
    %2401 = vmatpush1.bf16.msra.mxu0 %v1420
    %2402 = vmatprep.subr.bf16.mxu0 %v1429
    %2403 = vmatpush1.bf16.msra.mxu0 %v1428
    %2404 = vmatprep.subr.bf16.mxu0 %v1437
    %2405 = vmatpush1.bf16.msra.mxu0 %v1436
    %2406 = vmatprep.subr.bf16.mxu0 %v1445
    %2407 = vmatpush1.bf16.msra.mxu0 %v1444
    %2408 = vmatprep.subr.bf16.mxu0 %v1453
    %2409 = vmatpush1.bf16.msra.mxu0 %v1452
    %2410 = vmatprep.subr.bf16.mxu0 %v1461
    %2411 = vmatpush1.bf16.msra.mxu0 %v1460
    %2412 = vmatprep.subr.bf16.mxu0 %v1469
    %2413 = vmatpush1.bf16.msra.mxu0 %v1468
    %2414 = vmatprep.subr.bf16.mxu0 %v1477
    %2415 = vmatpush1.bf16.msra.mxu0 %v1476
    %2416 = vmatprep.subr.bf16.mxu0 %v1485
    %2417 = vmatpush1.bf16.msra.mxu0 %v1484
    %2418 = vmatprep.subr.bf16.mxu0 %v1493
    %2419 = vmatpush1.bf16.msra.mxu0 %v1492
    %2420 = vmatprep.subr.bf16.mxu0 %v1501
    %2421 = vmatpush1.bf16.msra.mxu0 %v1500
    %2422 = vmatprep.mubr.bf16.mxu0 %v128
    %2423 = vmatmul.mubr.bf16.gmra.mrb[0].mxu0 %v127
    %v2424 = vpop.f32.mrb[0].mxu0
    %v2425 = vadd.f32 %v461, %v2424
    %v2426 = vpop.f32.mrb[0].mxu0
    %v2427 = vadd.f32 %v465, %v2426
    %v2428 = vpop.f32.mrb[0].mxu0
    %v2429 = vadd.f32 %v461, %v2428
    %v2430 = vpop.f32.mrb[0].mxu0
    %v2431 = vadd.f32 %v465, %v2430
    %2432 = vdwg.mxu0
    %2433 = vmatprep.subr.bf16.mxu0 %v1509
    %2434 = vmatpush1.bf16.msra.mxu0 %v1508
    %2435 = vmatprep.subr.bf16.mxu0 %v1517
    %2436 = vmatpush1.bf16.msra.mxu0 %v1516
    %2437 = vmatprep.subr.bf16.mxu0 %v1525
    %2438 = vmatpush1.bf16.msra.mxu0 %v1524
    %2439 = vmatprep.subr.bf16.mxu0 %v1533
    %2440 = vmatpush1.bf16.msra.mxu0 %v1532
    %2441 = vmatprep.subr.bf16.mxu0 %v1541
    %2442 = vmatpush1.bf16.msra.mxu0 %v1540
    %2443 = vmatprep.subr.bf16.mxu0 %v1549
    %2444 = vmatpush1.bf16.msra.mxu0 %v1548
    %2445 = vmatprep.subr.bf16.mxu0 %v1557
    %2446 = vmatpush1.bf16.msra.mxu0 %v1556
    %2447 = vmatprep.subr.bf16.mxu0 %v1565
    %2448 = vmatpush1.bf16.msra.mxu0 %v1564
    %2449 = vmatprep.subr.bf16.mxu0 %v1573
    %2450 = vmatpush1.bf16.msra.mxu0 %v1572
    %2451 = vmatprep.subr.bf16.mxu0 %v1581
    %2452 = vmatpush1.bf16.msra.mxu0 %v1580
    %2453 = vmatprep.subr.bf16.mxu0 %v1589
    %2454 = vmatpush1.bf16.msra.mxu0 %v1588
    %2455 = vmatprep.subr.bf16.mxu0 %v1597
    %2456 = vmatpush1.bf16.msra.mxu0 %v1596
    %2457 = vmatprep.subr.bf16.mxu0 %v1605
    %2458 = vmatpush1.bf16.msra.mxu0 %v1604
    %2459 = vmatprep.subr.bf16.mxu0 %v1613
    %2460 = vmatpush1.bf16.msra.mxu0 %v1612
    %2461 = vmatprep.subr.bf16.mxu0 %v1621
    %2462 = vmatpush1.bf16.msra.mxu0 %v1620
    %2463 = vmatprep.subr.bf16.mxu0 %v1629
    %2464 = vmatpush1.bf16.msra.mxu0 %v1628
    %2465 = vmatprep.mubr.bf16.mxu0 %v130
    %2466 = vmatmul.mubr.bf16.gmra.mrb[0].mxu0 %v129
    %v2467 = vpop.f32.mrb[0].mxu0
    %v2468 = vadd.f32 %v2425, %v2467
    %v2469 = vpop.f32.mrb[0].mxu0
    %v2470 = vadd.f32 %v2427, %v2469
    %v2471 = vpop.f32.mrb[0].mxu0
    %v2472 = vadd.f32 %v2429, %v2471
    %v2473 = vpop.f32.mrb[0].mxu0
    %v2474 = vadd.f32 %v2431, %v2473
    %2475 = vdwg.mxu0
    %2476 = vmatprep.subr.bf16.mxu0 %v1637
    %2477 = vmatpush1.bf16.msra.mxu0 %v1636
    %2478 = vmatprep.subr.bf16.mxu0 %v1645
    %2479 = vmatpush1.bf16.msra.mxu0 %v1644
    %2480 = vmatprep.subr.bf16.mxu0 %v1653
    %2481 = vmatpush1.bf16.msra.mxu0 %v1652
    %2482 = vmatprep.subr.bf16.mxu0 %v1661
    %2483 = vmatpush1.bf16.msra.mxu0 %v1660
    %2484 = vmatprep.subr.bf16.mxu0 %v1669
    %2485 = vmatpush1.bf16.msra.mxu0 %v1668
    %2486 = vmatprep.subr.bf16.mxu0 %v2001
    %2487 = vmatpush1.bf16.msra.mxu0 %v1998
    %2488 = vmatprep.subr.bf16.mxu0 0
    %2489 = vmatpush1.bf16.msra.mxu0 0
    %2490 = vmatprep.subr.bf16.mxu0 0
    %2491 = vmatpush1.bf16.msra.mxu0 0
    %2492 = vmatprep.subr.bf16.mxu0 0
    %2493 = vmatpush1.bf16.msra.mxu0 0
    %2494 = vmatprep.subr.bf16.mxu0 0
    %2495 = vmatpush1.bf16.msra.mxu0 0
    %2496 = vmatprep.subr.bf16.mxu0 0
    %2497 = vmatpush1.bf16.msra.mxu0 0
    %2498 = vmatprep.subr.bf16.mxu0 0
    %2499 = vmatpush1.bf16.msra.mxu0 0
    %2500 = vmatprep.subr.bf16.mxu0 0
    %2501 = vmatpush1.bf16.msra.mxu0 0
    %2502 = vmatprep.subr.bf16.mxu0 0
    %2503 = vmatpush1.bf16.msra.mxu0 0
    %2504 = vmatprep.subr.bf16.mxu0 0
    %2505 = vmatpush1.bf16.msra.mxu0 0
    %2506 = vmatprep.subr.bf16.mxu0 0
    %2507 = vmatpush1.bf16.msra.mxu0 0
    %2508 = vmatprep.mubr.bf16.mxu0 0
    %2509 = vmatmul.mubr.bf16.gmra.mrb[0].mxu0 %v1976
    %v2510 = vpop.f32.mrb[0].mxu0
    %v2511 = vadd.f32 %v2468, %v2510
    %v2512 = vpop.f32.mrb[0].mxu0
    %v2513 = vadd.f32 %v2470, %v2512
    %v2514 = vpop.f32.mrb[0].mxu0
    %v2515 = vadd.f32 %v2472, %v2514
    %v2516 = vpop.f32.mrb[0].mxu0
    %v2517 = vadd.f32 %v2474, %v2516
    %2518 = vdwg.mxu0
    %v2519 = vmax.f32 %v2124, 0.0
    %v2520 = vmax.f32 %v2126, 0.0
    %v2521 = vmax.f32 %v2253, 0.0
    %v2522 = vmax.f32 %v2255, 0.0
    %v2523 = vmax.f32 %v2382, 0.0
    %v2524 = vmax.f32 %v2384, 0.0
    %v2525 = vmax.f32 %v2511, 0.0
    %v2526 = vmax.f32 %v2513, 0.0
    %v2527 = vmax.f32 %v2128, 0.0
    %v2528 = vmax.f32 %v2130, 0.0
    %v2529 = vmax.f32 %v2257, 0.0
    %v2530 = vmax.f32 %v2259, 0.0
    %v2531 = vmax.f32 %v2386, 0.0
    %v2532 = vmax.f32 %v2388, 0.0
    %v2533 = vmax.f32 %v2515, 0.0
    %v2534 = vmax.f32 %v2517, 0.0
    %v2535 = vpack.c.bf16 %v2527, %v2519
    %v2536 = vpack.c.bf16 %v2528, %v2520
    %v2537 = vpack.c.bf16 %v2529, %v2521
    %v2538 = vpack.c.bf16 %v2530, %v2522
    %v2539 = vpack.c.bf16 %v2531, %v2523
    %v2540 = vpack.c.bf16 %v2532, %v2524
    %v2541 = vpack.c.bf16 %v2533, %v2525
    %v2542 = vpack.c.bf16 %v2534, %v2526
    %v2543 = vld [vmem:[#allocation8] sm:$0xff]
    %v2544 = vld [vmem:[#allocation8 + $0x8] sm:$0xff]
    %v2545 = vld [vmem:[#allocation8 + $0x10] sm:$0xff]
    %v2546 = vld [vmem:[#allocation8 + $0x18] sm:$0xff]
    %v2547 = vld [vmem:[#allocation8 + $0x20] sm:$0xff]
    %v2548 = vld [vmem:[#allocation8 + $0x28] sm:$0xff]
    %v2549 = vld [vmem:[#allocation8 + $0x30] sm:$0xff]
    %v2550 = vld [vmem:[#allocation8 + $0x38] sm:$0xff]
    %v2551 = vld [vmem:[#allocation8 + $0x40] sm:$0xff]
    %v2552 = vld [vmem:[#allocation8 + $0x48] sm:$0xff]
    %v2553 = vld [vmem:[#allocation8 + $0x50] sm:$0xff]
    %v2554 = vld [vmem:[#allocation8 + $0x58] sm:$0xff]
    %v2555 = vld [vmem:[#allocation8 + $0x60] sm:$0xff]
    %v2556 = vld [vmem:[#allocation8 + $0x68] sm:$0xff]
    %v2557 = vld [vmem:[#allocation8 + $0x70] sm:$0xff]
    %v2558 = vld [vmem:[#allocation8 + $0x78] sm:$0xff]
    %v2559 = vld [vmem:[#allocation8 + $0x80] sm:$0xff]
    %v2560 = vld [vmem:[#allocation8 + $0x88] sm:$0xff]
    %v2561 = vld [vmem:[#allocation8 + $0x90] sm:$0xff]
    %v2562 = vld [vmem:[#allocation8 + $0x98] sm:$0xff]
    %v2563 = vld [vmem:[#allocation8 + $0xa0] sm:$0xff]
    %v2564 = vld [vmem:[#allocation8 + $0xa8] sm:$0xff]
    %v2565 = vld [vmem:[#allocation8 + $0xb0] sm:$0xff]
    %v2566 = vld [vmem:[#allocation8 + $0xb8] sm:$0xff]
    %v2567 = vld [vmem:[#allocation8 + $0xc0] sm:$0xff]
    %v2568 = vld [vmem:[#allocation8 + $0xc8] sm:$0xff]
    %v2569 = vld [vmem:[#allocation8 + $0xd0] sm:$0xff]
    %v2570 = vld [vmem:[#allocation8 + $0xd8] sm:$0xff]
    %v2571 = vld [vmem:[#allocation8 + $0xe0] sm:$0xff]
    %v2572 = vld [vmem:[#allocation8 + $0xe8] sm:$0xff]
    %v2573 = vld [vmem:[#allocation8 + $0xf0] sm:$0xff]
    %v2574 = vld [vmem:[#allocation8 + $0xf8] sm:$0xff]
    %v2575 = vld [vmem:[#allocation8 + $0x100] sm:$0xff]
    %v2576 = vld [vmem:[#allocation8 + $0x108] sm:$0xff]
    %v2577 = vld [vmem:[#allocation8 + $0x110] sm:$0xff]
    %v2578 = vld [vmem:[#allocation8 + $0x118] sm:$0xff]
    %v2579 = vld [vmem:[#allocation8 + $0x120] sm:$0xff]
    %v2580 = vld [vmem:[#allocation8 + $0x128] sm:$0xff]
    %v2581 = vld [vmem:[#allocation8 + $0x130] sm:$0xff]
    %v2582 = vld [vmem:[#allocation8 + $0x138] sm:$0xff]
    %v2583 = vld [vmem:[#allocation8 + $0x140] sm:$0xff]
    %v2584 = vld [vmem:[#allocation8 + $0x148] sm:$0xff]
    %v2585 = vld [vmem:[#allocation8 + $0x150] sm:$0xff]
    %v2586 = vld [vmem:[#allocation8 + $0x158] sm:$0xff]
    %v2587 = vld [vmem:[#allocation8 + $0x160] sm:$0xff]
    %v2588 = vld [vmem:[#allocation8 + $0x168] sm:$0xff]
    %v2589 = vld [vmem:[#allocation8 + $0x170] sm:$0xff]
    %v2590 = vld [vmem:[#allocation8 + $0x178] sm:$0xff]
    %v2591 = vld [vmem:[#allocation8 + $0x180] sm:$0xff]
    %v2592 = vld [vmem:[#allocation8 + $0x188] sm:$0xff]
    %v2593 = vld [vmem:[#allocation8 + $0x190] sm:$0xff]
    %v2594 = vld [vmem:[#allocation8 + $0x198] sm:$0xff]
    %v2595 = vld [vmem:[#allocation8 + $0x1a0] sm:$0xff]
    %v2596 = vld [vmem:[#allocation8 + $0x1a8] sm:$0xff]
    %v2597 = vld [vmem:[#allocation8 + $0x1b0] sm:$0xff]
    %v2598 = vld [vmem:[#allocation8 + $0x1b8] sm:$0xff]
    %v2599 = vld [vmem:[#allocation8 + $0x1c0] sm:$0xff]
    %v2600 = vld [vmem:[#allocation8 + $0x1c8] sm:$0xff]
    %v2601 = vld [vmem:[#allocation8 + $0x1d0] sm:$0xff]
    %v2602 = vld [vmem:[#allocation8 + $0x1d8] sm:$0xff]
    %v2603 = vld [vmem:[#allocation8 + $0x1e0] sm:$0xff]
    %v2604 = vld [vmem:[#allocation8 + $0x1e8] sm:$0xff]
    %v2605 = vld [vmem:[#allocation8 + $0x1f0] sm:$0xff]
    %v2606 = vld [vmem:[#allocation8 + $0x1f8] sm:$0xff]
    %v2607 = vld [vmem:[#allocation8 + $0x200] sm:$0xff]
    %v2608 = vld [vmem:[#allocation8 + $0x208] sm:$0xff]
    %v2609 = vld [vmem:[#allocation8 + $0x210] sm:$0xff]
    %v2610 = vld [vmem:[#allocation8 + $0x218] sm:$0xff]
    %v2611 = vld [vmem:[#allocation8 + $0x220] sm:$0xff]
    %v2612 = vld [vmem:[#allocation8 + $0x228] sm:$0xff]
    %v2613 = vld [vmem:[#allocation8 + $0x230] sm:$0xff]
    %v2614 = vld [vmem:[#allocation8 + $0x238] sm:$0xff]
    %v2615 = vld [vmem:[#allocation8 + $0x240] sm:$0xff]
    %v2616 = vld [vmem:[#allocation8 + $0x248] sm:$0xff]
    %v2617 = vld [vmem:[#allocation8 + $0x250] sm:$0xff]
    %v2618 = vld [vmem:[#allocation8 + $0x258] sm:$0xff]
    %v2619 = vld [vmem:[#allocation8 + $0x260] sm:$0xff]
    %v2620 = vld [vmem:[#allocation8 + $0x268] sm:$0xff]
    %v2621 = vld [vmem:[#allocation8 + $0x270] sm:$0xff]
    %v2622 = vld [vmem:[#allocation8 + $0x278] sm:$0xff]
    %v2623 = vld [vmem:[#allocation8 + $0x280] sm:$0xff]
    %v2624 = vld [vmem:[#allocation8 + $0x288] sm:$0xff]
    %v2625 = vld [vmem:[#allocation8 + $0x290] sm:$0xff]
    %v2626 = vld [vmem:[#allocation8 + $0x298] sm:$0xff]
    %v2627 = vld [vmem:[#allocation8 + $0x2a0] sm:$0xff]
    %v2628 = vld [vmem:[#allocation8 + $0x2a8] sm:$0xff]
    %v2629 = vld [vmem:[#allocation8 + $0x2b0] sm:$0xff]
    %v2630 = vld [vmem:[#allocation8 + $0x2b8] sm:$0xff]
    %v2631 = vld [vmem:[#allocation8 + $0x2c0] sm:$0xff]
    %v2632 = vld [vmem:[#allocation8 + $0x2c8] sm:$0xff]
    %v2633 = vld [vmem:[#allocation8 + $0x2d0] sm:$0xff]
    %v2634 = vld [vmem:[#allocation8 + $0x2d8] sm:$0xff]
    %v2635 = vld [vmem:[#allocation8 + $0x2e0] sm:$0xff]
    %v2636 = vld [vmem:[#allocation8 + $0x2e8] sm:$0xff]
    %v2637 = vld [vmem:[#allocation8 + $0x2f0] sm:$0xff]
    %v2638 = vld [vmem:[#allocation8 + $0x2f8] sm:$0xff]
    %v2639 = vld [vmem:[#allocation8 + $0x300] sm:$0xff]
    %v2640 = vld [vmem:[#allocation8 + $0x308] sm:$0xff]
    %v2641 = vld [vmem:[#allocation8 + $0x310] sm:$0xff]
    %v2642 = vld [vmem:[#allocation8 + $0x318] sm:$0xff]
    %v2643 = vld [vmem:[#allocation8 + $0x320] sm:$0xff]
    %v2644 = vld [vmem:[#allocation8 + $0x328] sm:$0xff]
    %v2645 = vld [vmem:[#allocation8 + $0x330] sm:$0xff]
    %v2646 = vld [vmem:[#allocation8 + $0x338] sm:$0xff]
    %v2647 = vld [vmem:[#allocation8 + $0x340] sm:$0xff]
    %v2648 = vld [vmem:[#allocation8 + $0x348] sm:$0xff]
    %v2649 = vld [vmem:[#allocation8 + $0x350] sm:$0xff]
    %v2650 = vld [vmem:[#allocation8 + $0x358] sm:$0xff]
    %v2651 = vld [vmem:[#allocation8 + $0x360] sm:$0xff]
    %v2652 = vld [vmem:[#allocation8 + $0x368] sm:$0xff]
    %v2653 = vld [vmem:[#allocation8 + $0x370] sm:$0xff]
    %v2654 = vld [vmem:[#allocation8 + $0x378] sm:$0xff]
    %v2655 = vld [vmem:[#allocation8 + $0x380] sm:$0xff]
    %v2656 = vld [vmem:[#allocation8 + $0x388] sm:$0xff]
    %v2657 = vld [vmem:[#allocation8 + $0x390] sm:$0xff]
    %v2658 = vld [vmem:[#allocation8 + $0x398] sm:$0xff]
    %v2659 = vld [vmem:[#allocation8 + $0x3a0] sm:$0xff]
    %v2660 = vld [vmem:[#allocation8 + $0x3a8] sm:$0xff]
    %v2661 = vld [vmem:[#allocation8 + $0x3b0] sm:$0xff]
    %v2662 = vld [vmem:[#allocation8 + $0x3b8] sm:$0xff]
    %v2663 = vld [vmem:[#allocation8 + $0x3c0] sm:$0xff]
    %v2664 = vld [vmem:[#allocation8 + $0x3c8] sm:$0xff]
    %v2665 = vld [vmem:[#allocation8 + $0x3d0] sm:$0xff]
    %v2666 = vld [vmem:[#allocation8 + $0x3d8] sm:$0xff]
    %v2667 = vld [vmem:[#allocation8 + $0x3e0] sm:$0xff]
    %v2668 = vld [vmem:[#allocation8 + $0x3e8] sm:$0xff]
    %v2669 = vld [vmem:[#allocation8 + $0x3f0] sm:$0xff]
    %v2670 = vld [vmem:[#allocation8 + $0x3f8] sm:$0xff]
    %v2671 = vld [vmem:[#allocation10] sm:$0x3]
    %v2673 = vlaneseq
    %v2674 = vshrl.u32 %v2673, 7
    %v2675 = vsub.s32 0, %v2674
    %v2676 = vrot.slane %v2671, %v2675
    %v2677 = vlaneseq
    %v2678 = vshrl.u32 %v2677, 7
    %v2679 = vsub.s32 1, %v2678
    %v2680 = vrot.slane %v2671, %v2679
    %v2811 = vunpack.c.l.b16 %v2543
    %v2812 = vunpack.c.h.b16 %v2543
    %v2813 = vunpack.c.l.b16 %v2544
    %v2814 = vunpack.c.h.b16 %v2544
    %v2815 = vunpack.c.l.b16 %v2545
    %v2816 = vunpack.c.h.b16 %v2545
    %v2817 = vunpack.c.l.b16 %v2546
    %v2818 = vunpack.c.h.b16 %v2546
    %v2819 = vunpack.c.l.b16 %v2547
    %v2820 = vunpack.c.h.b16 %v2547
    %v2821 = vunpack.c.l.b16 %v2548
    %v2822 = vunpack.c.h.b16 %v2548
    %v2823 = vunpack.c.l.b16 %v2549
    %v2824 = vunpack.c.h.b16 %v2549
    %v2825 = vunpack.c.l.b16 %v2550
    %v2826 = vunpack.c.h.b16 %v2550
    %v2827 = vunpack.c.l.b16 %v2551
    %v2828 = vunpack.c.h.b16 %v2551
    %v2829 = vunpack.c.l.b16 %v2552
    %v2830 = vunpack.c.h.b16 %v2552
    %v2831 = vunpack.c.l.b16 %v2553
    %v2832 = vunpack.c.h.b16 %v2553
    %v2833 = vunpack.c.l.b16 %v2554
    %v2834 = vunpack.c.h.b16 %v2554
    %v2835 = vunpack.c.l.b16 %v2555
    %v2836 = vunpack.c.h.b16 %v2555
    %v2837 = vunpack.c.l.b16 %v2556
    %v2838 = vunpack.c.h.b16 %v2556
    %v2839 = vunpack.c.l.b16 %v2557
    %v2840 = vunpack.c.h.b16 %v2557
    %v2841 = vunpack.c.l.b16 %v2558
    %v2842 = vunpack.c.h.b16 %v2558
    %v2843 = vunpack.c.l.b16 %v2559
    %v2844 = vunpack.c.h.b16 %v2559
    %v2845 = vunpack.c.l.b16 %v2560
    %v2846 = vunpack.c.h.b16 %v2560
    %v2847 = vunpack.c.l.b16 %v2561
    %v2848 = vunpack.c.h.b16 %v2561
    %v2849 = vunpack.c.l.b16 %v2562
    %v2850 = vunpack.c.h.b16 %v2562
    %v2851 = vunpack.c.l.b16 %v2563
    %v2852 = vunpack.c.h.b16 %v2563
    %v2853 = vunpack.c.l.b16 %v2564
    %v2854 = vunpack.c.h.b16 %v2564
    %v2855 = vunpack.c.l.b16 %v2565
    %v2856 = vunpack.c.h.b16 %v2565
    %v2857 = vunpack.c.l.b16 %v2566
    %v2858 = vunpack.c.h.b16 %v2566
    %v2859 = vunpack.c.l.b16 %v2567
    %v2860 = vunpack.c.h.b16 %v2567
    %v2861 = vunpack.c.l.b16 %v2568
    %v2862 = vunpack.c.h.b16 %v2568
    %v2863 = vunpack.c.l.b16 %v2569
    %v2864 = vunpack.c.h.b16 %v2569
    %v2865 = vunpack.c.l.b16 %v2570
    %v2866 = vunpack.c.h.b16 %v2570
    %v2867 = vunpack.c.l.b16 %v2571
    %v2868 = vunpack.c.h.b16 %v2571
    %v2869 = vunpack.c.l.b16 %v2572
    %v2870 = vunpack.c.h.b16 %v2572
    %v2871 = vunpack.c.l.b16 %v2573
    %v2872 = vunpack.c.h.b16 %v2573
    %v2873 = vunpack.c.l.b16 %v2574
    %v2874 = vunpack.c.h.b16 %v2574
    %v2875 = vunpack.c.l.b16 %v2575
    %v2876 = vunpack.c.h.b16 %v2575
    %v2877 = vunpack.c.l.b16 %v2576
    %v2878 = vunpack.c.h.b16 %v2576
    %v2879 = vunpack.c.l.b16 %v2577
    %v2880 = vunpack.c.h.b16 %v2577
    %v2881 = vunpack.c.l.b16 %v2578
    %v2882 = vunpack.c.h.b16 %v2578
    %v2883 = vunpack.c.l.b16 %v2579
    %v2884 = vunpack.c.h.b16 %v2579
    %v2885 = vunpack.c.l.b16 %v2580
    %v2886 = vunpack.c.h.b16 %v2580
    %v2887 = vunpack.c.l.b16 %v2581
    %v2888 = vunpack.c.h.b16 %v2581
    %v2889 = vunpack.c.l.b16 %v2582
    %v2890 = vunpack.c.h.b16 %v2582
    %v2891 = vunpack.c.l.b16 %v2583
    %v2892 = vunpack.c.h.b16 %v2583
    %v2893 = vunpack.c.l.b16 %v2584
    %v2894 = vunpack.c.h.b16 %v2584
    %v2895 = vunpack.c.l.b16 %v2585
    %v2896 = vunpack.c.h.b16 %v2585
    %v2897 = vunpack.c.l.b16 %v2586
    %v2898 = vunpack.c.h.b16 %v2586
    %v2899 = vunpack.c.l.b16 %v2587
    %v2900 = vunpack.c.h.b16 %v2587
    %v2901 = vunpack.c.l.b16 %v2588
    %v2902 = vunpack.c.h.b16 %v2588
    %v2903 = vunpack.c.l.b16 %v2589
    %v2904 = vunpack.c.h.b16 %v2589
    %v2905 = vunpack.c.l.b16 %v2590
    %v2906 = vunpack.c.h.b16 %v2590
    %v2907 = vunpack.c.l.b16 %v2591
    %v2908 = vunpack.c.h.b16 %v2591
    %v2909 = vunpack.c.l.b16 %v2592
    %v2910 = vunpack.c.h.b16 %v2592
    %v2911 = vunpack.c.l.b16 %v2593
    %v2912 = vunpack.c.h.b16 %v2593
    %v2913 = vunpack.c.l.b16 %v2594
    %v2914 = vunpack.c.h.b16 %v2594
    %v2915 = vunpack.c.l.b16 %v2595
    %v2916 = vunpack.c.h.b16 %v2595
    %v2917 = vunpack.c.l.b16 %v2596
    %v2918 = vunpack.c.h.b16 %v2596
    %v2919 = vunpack.c.l.b16 %v2597
    %v2920 = vunpack.c.h.b16 %v2597
    %v2921 = vunpack.c.l.b16 %v2598
    %v2922 = vunpack.c.h.b16 %v2598
    %v2923 = vunpack.c.l.b16 %v2599
    %v2924 = vunpack.c.h.b16 %v2599
    %v2925 = vunpack.c.l.b16 %v2600
    %v2926 = vunpack.c.h.b16 %v2600
    %v2927 = vunpack.c.l.b16 %v2601
    %v2928 = vunpack.c.h.b16 %v2601
    %v2929 = vunpack.c.l.b16 %v2602
    %v2930 = vunpack.c.h.b16 %v2602
    %v2931 = vunpack.c.l.b16 %v2603
    %v2932 = vunpack.c.h.b16 %v2603
    %v2933 = vunpack.c.l.b16 %v2604
    %v2934 = vunpack.c.h.b16 %v2604
    %v2935 = vunpack.c.l.b16 %v2605
    %v2936 = vunpack.c.h.b16 %v2605
    %v2937 = vunpack.c.l.b16 %v2606
    %v2938 = vunpack.c.h.b16 %v2606
    %v2939 = vunpack.c.l.b16 %v2607
    %v2940 = vunpack.c.h.b16 %v2607
    %v2941 = vunpack.c.l.b16 %v2608
    %v2942 = vunpack.c.h.b16 %v2608
    %v2943 = vunpack.c.l.b16 %v2609
    %v2944 = vunpack.c.h.b16 %v2609
    %v2945 = vunpack.c.l.b16 %v2610
    %v2946 = vunpack.c.h.b16 %v2610
    %v2947 = vunpack.c.l.b16 %v2611
    %v2948 = vunpack.c.h.b16 %v2611
    %v2949 = vunpack.c.l.b16 %v2612
    %v2950 = vunpack.c.h.b16 %v2612
    %v2951 = vunpack.c.l.b16 %v2613
    %v2952 = vunpack.c.h.b16 %v2613
    %v2953 = vunpack.c.l.b16 %v2614
    %v2954 = vunpack.c.h.b16 %v2614
    %v2955 = vunpack.c.l.b16 %v2615
    %v2956 = vunpack.c.h.b16 %v2615
    %v2957 = vunpack.c.l.b16 %v2616
    %v2958 = vunpack.c.h.b16 %v2616
    %v2959 = vunpack.c.l.b16 %v2617
    %v2960 = vunpack.c.h.b16 %v2617
    %v2961 = vunpack.c.l.b16 %v2618
    %v2962 = vunpack.c.h.b16 %v2618
    %v2963 = vunpack.c.l.b16 %v2619
    %v2964 = vunpack.c.h.b16 %v2619
    %v2965 = vunpack.c.l.b16 %v2620
    %v2966 = vunpack.c.h.b16 %v2620
    %v2967 = vunpack.c.l.b16 %v2621
    %v2968 = vunpack.c.h.b16 %v2621
    %v2969 = vunpack.c.l.b16 %v2622
    %v2970 = vunpack.c.h.b16 %v2622
    %v2971 = vunpack.c.l.b16 %v2623
    %v2972 = vunpack.c.h.b16 %v2623
    %v2973 = vunpack.c.l.b16 %v2624
    %v2974 = vunpack.c.h.b16 %v2624
    %v2975 = vunpack.c.l.b16 %v2625
    %v2976 = vunpack.c.h.b16 %v2625
    %v2977 = vunpack.c.l.b16 %v2626
    %v2978 = vunpack.c.h.b16 %v2626
    %v2979 = vunpack.c.l.b16 %v2627
    %v2980 = vunpack.c.h.b16 %v2627
    %v2981 = vunpack.c.l.b16 %v2628
    %v2982 = vunpack.c.h.b16 %v2628
    %v2983 = vunpack.c.l.b16 %v2629
    %v2984 = vunpack.c.h.b16 %v2629
    %v2985 = vunpack.c.l.b16 %v2630
    %v2986 = vunpack.c.h.b16 %v2630
    %v2987 = vunpack.c.l.b16 %v2631
    %v2988 = vunpack.c.h.b16 %v2631
    %v2989 = vunpack.c.l.b16 %v2632
    %v2990 = vunpack.c.h.b16 %v2632
    %v2991 = vunpack.c.l.b16 %v2633
    %v2992 = vunpack.c.h.b16 %v2633
    %v2993 = vunpack.c.l.b16 %v2634
    %v2994 = vunpack.c.h.b16 %v2634
    %v2995 = vunpack.c.l.b16 %v2635
    %v2996 = vunpack.c.h.b16 %v2635
    %v2997 = vunpack.c.l.b16 %v2636
    %v2998 = vunpack.c.h.b16 %v2636
    %v2999 = vunpack.c.l.b16 %v2637
    %v3000 = vunpack.c.h.b16 %v2637
    %v3001 = vunpack.c.l.b16 %v2638
    %v3002 = vunpack.c.h.b16 %v2638
    %v3003 = vunpack.c.l.b16 %v2639
    %v3004 = vunpack.c.h.b16 %v2639
    %v3005 = vunpack.c.l.b16 %v2640
    %v3006 = vunpack.c.h.b16 %v2640
    %v3007 = vunpack.c.l.b16 %v2641
    %v3008 = vunpack.c.h.b16 %v2641
    %v3009 = vunpack.c.l.b16 %v2642
    %v3010 = vunpack.c.h.b16 %v2642
    %v3011 = vunpack.c.l.b16 %v2643
    %v3012 = vunpack.c.h.b16 %v2643
    %v3013 = vunpack.c.l.b16 %v2644
    %v3014 = vunpack.c.h.b16 %v2644
    %v3015 = vunpack.c.l.b16 %v2645
    %v3016 = vunpack.c.h.b16 %v2645
    %v3017 = vunpack.c.l.b16 %v2646
    %v3018 = vunpack.c.h.b16 %v2646
    %v3019 = vunpack.c.l.b16 %v2647
    %v3020 = vunpack.c.h.b16 %v2647
    %v3021 = vunpack.c.l.b16 %v2648
    %v3022 = vunpack.c.h.b16 %v2648
    %v3023 = vunpack.c.l.b16 %v2649
    %v3024 = vunpack.c.h.b16 %v2649
    %v3025 = vunpack.c.l.b16 %v2650
    %v3026 = vunpack.c.h.b16 %v2650
    %v3027 = vunpack.c.l.b16 %v2651
    %v3028 = vunpack.c.h.b16 %v2651
    %v3029 = vunpack.c.l.b16 %v2652
    %v3030 = vunpack.c.h.b16 %v2652
    %v3031 = vunpack.c.l.b16 %v2653
    %v3032 = vunpack.c.h.b16 %v2653
    %v3033 = vunpack.c.l.b16 %v2654
    %v3034 = vunpack.c.h.b16 %v2654
    %v3035 = vunpack.c.l.b16 %v2655
    %v3036 = vunpack.c.h.b16 %v2655
    %v3037 = vunpack.c.l.b16 %v2656
    %v3038 = vunpack.c.h.b16 %v2656
    %v3039 = vunpack.c.l.b16 %v2657
    %v3040 = vunpack.c.h.b16 %v2657
    %v3041 = vunpack.c.l.b16 %v2658
    %v3042 = vunpack.c.h.b16 %v2658
    %v3043 = vunpack.c.l.b16 %v2659
    %v3044 = vunpack.c.h.b16 %v2659
    %v3045 = vunpack.c.l.b16 %v2660
    %v3046 = vunpack.c.h.b16 %v2660
    %v3047 = vunpack.c.l.b16 %v2661
    %v3048 = vunpack.c.h.b16 %v2661
    %v3049 = vunpack.c.l.b16 %v2662
    %v3050 = vunpack.c.h.b16 %v2662
    %v3051 = vunpack.c.l.b16 %v2663
    %v3052 = vunpack.c.h.b16 %v2663
    %v3053 = vunpack.c.l.b16 %v2664
    %v3054 = vunpack.c.h.b16 %v2664
    %v3055 = vunpack.c.l.b16 %v2665
    %v3056 = vunpack.c.h.b16 %v2665
    %v3057 = vunpack.c.l.b16 %v2666
    %v3058 = vunpack.c.h.b16 %v2666
    %v3059 = vunpack.c.l.b16 %v2667
    %v3060 = vunpack.c.h.b16 %v2667
    %v3061 = vunpack.c.l.b16 %v2668
    %v3062 = vunpack.c.h.b16 %v2668
    %v3063 = vunpack.c.l.b16 %v2669
    %v3064 = vunpack.c.h.b16 %v2669
    %v3065 = vunpack.c.l.b16 %v2670
    %v3066 = vunpack.c.h.b16 %v2670
    %v3067 = vpack.c.b16 %v2813, %v2811
    %v3068 = vpack.c.b16 %v2814, %v2812
    %v3069 = vpack.c.b16 %v2817, %v2815
    %v3070 = vpack.c.b16 %v2818, %v2816
    %v3071 = vpack.c.b16 %v2821, %v2819
    %v3072 = vpack.c.b16 %v2822, %v2820
    %v3073 = vpack.c.b16 %v2825, %v2823
    %v3074 = vpack.c.b16 %v2826, %v2824
    %v3075 = vpack.c.b16 %v2829, %v2827
    %v3076 = vpack.c.b16 %v2830, %v2828
    %v3077 = vpack.c.b16 %v2833, %v2831
    %v3078 = vpack.c.b16 %v2834, %v2832
    %v3079 = vpack.c.b16 %v2837, %v2835
    %v3080 = vpack.c.b16 %v2838, %v2836
    %v3081 = vpack.c.b16 %v2841, %v2839
    %v3082 = vpack.c.b16 %v2842, %v2840
    %v3083 = vpack.c.b16 %v2845, %v2843
    %v3084 = vpack.c.b16 %v2846, %v2844
    %v3085 = vpack.c.b16 %v2849, %v2847
    %v3086 = vpack.c.b16 %v2850, %v2848
    %v3087 = vpack.c.b16 %v2853, %v2851
    %v3088 = vpack.c.b16 %v2854, %v2852
    %v3089 = vpack.c.b16 %v2857, %v2855
    %v3090 = vpack.c.b16 %v2858, %v2856
    %v3091 = vpack.c.b16 %v2861, %v2859
    %v3092 = vpack.c.b16 %v2862, %v2860
    %v3093 = vpack.c.b16 %v2865, %v2863
    %v3094 = vpack.c.b16 %v2866, %v2864
    %v3095 = vpack.c.b16 %v2869, %v2867
    %v3096 = vpack.c.b16 %v2870, %v2868
    %v3097 = vpack.c.b16 %v2873, %v2871
    %v3098 = vpack.c.b16 %v2874, %v2872
    %v3099 = vpack.c.b16 %v2877, %v2875
    %v3100 = vpack.c.b16 %v2878, %v2876
    %v3101 = vpack.c.b16 %v2881, %v2879
    %v3102 = vpack.c.b16 %v2882, %v2880
    %v3103 = vpack.c.b16 %v2885, %v2883
    %v3104 = vpack.c.b16 %v2886, %v2884
    %v3105 = vpack.c.b16 %v2889, %v2887
    %v3106 = vpack.c.b16 %v2890, %v2888
    %v3107 = vpack.c.b16 %v2893, %v2891
    %v3108 = vpack.c.b16 %v2894, %v2892
    %v3109 = vpack.c.b16 %v2897, %v2895
    %v3110 = vpack.c.b16 %v2898, %v2896
    %v3111 = vpack.c.b16 %v2901, %v2899
    %v3112 = vpack.c.b16 %v2902, %v2900
    %v3113 = vpack.c.b16 %v2905, %v2903
    %v3114 = vpack.c.b16 %v2906, %v2904
    %v3115 = vpack.c.b16 %v2909, %v2907
    %v3116 = vpack.c.b16 %v2910, %v2908
    %v3117 = vpack.c.b16 %v2913, %v2911
    %v3118 = vpack.c.b16 %v2914, %v2912
    %v3119 = vpack.c.b16 %v2917, %v2915
    %v3120 = vpack.c.b16 %v2918, %v2916
    %v3121 = vpack.c.b16 %v2921, %v2919
    %v3122 = vpack.c.b16 %v2922, %v2920
    %v3123 = vpack.c.b16 %v2925, %v2923
    %v3124 = vpack.c.b16 %v2926, %v2924
    %v3125 = vpack.c.b16 %v2929, %v2927
    %v3126 = vpack.c.b16 %v2930, %v2928
    %v3127 = vpack.c.b16 %v2933, %v2931
    %v3128 = vpack.c.b16 %v2934, %v2932
    %v3129 = vpack.c.b16 %v2937, %v2935
    %v3130 = vpack.c.b16 %v2938, %v2936
    %v3131 = vpack.c.b16 %v2941, %v2939
    %v3132 = vpack.c.b16 %v2942, %v2940
    %v3133 = vpack.c.b16 %v2945, %v2943
    %v3134 = vpack.c.b16 %v2946, %v2944
    %v3135 = vpack.c.b16 %v2949, %v2947
    %v3136 = vpack.c.b16 %v2950, %v2948
    %v3137 = vpack.c.b16 %v2953, %v2951
    %v3138 = vpack.c.b16 %v2954, %v2952
    %v3139 = vpack.c.b16 %v2957, %v2955
    %v3140 = vpack.c.b16 %v2958, %v2956
    %v3141 = vpack.c.b16 %v2961, %v2959
    %v3142 = vpack.c.b16 %v2962, %v2960
    %v3143 = vpack.c.b16 %v2965, %v2963
    %v3144 = vpack.c.b16 %v2966, %v2964
    %v3145 = vpack.c.b16 %v2969, %v2967
    %v3146 = vpack.c.b16 %v2970, %v2968
    %v3147 = vpack.c.b16 %v2973, %v2971
    %v3148 = vpack.c.b16 %v2974, %v2972
    %v3149 = vpack.c.b16 %v2977, %v2975
    %v3150 = vpack.c.b16 %v2978, %v2976
    %v3151 = vpack.c.b16 %v2981, %v2979
    %v3152 = vpack.c.b16 %v2982, %v2980
    %v3153 = vpack.c.b16 %v2985, %v2983
    %v3154 = vpack.c.b16 %v2986, %v2984
    %v3155 = vpack.c.b16 %v2989, %v2987
    %v3156 = vpack.c.b16 %v2990, %v2988
    %v3157 = vpack.c.b16 %v2993, %v2991
    %v3158 = vpack.c.b16 %v2994, %v2992
    %v3159 = vpack.c.b16 %v2997, %v2995
    %v3160 = vpack.c.b16 %v2998, %v2996
    %v3161 = vpack.c.b16 %v3001, %v2999
    %v3162 = vpack.c.b16 %v3002, %v3000
    %v3163 = vpack.c.b16 %v3005, %v3003
    %v3164 = vpack.c.b16 %v3006, %v3004
    %v3165 = vpack.c.b16 %v3009, %v3007
    %v3166 = vpack.c.b16 %v3010, %v3008
    %v3167 = vpack.c.b16 %v3013, %v3011
    %v3168 = vpack.c.b16 %v3014, %v3012
    %v3169 = vpack.c.b16 %v3017, %v3015
    %v3170 = vpack.c.b16 %v3018, %v3016
    %v3171 = vpack.c.b16 %v3021, %v3019
    %v3172 = vpack.c.b16 %v3022, %v3020
    %v3173 = vpack.c.b16 %v3025, %v3023
    %v3174 = vpack.c.b16 %v3026, %v3024
    %v3175 = vpack.c.b16 %v3029, %v3027
    %v3176 = vpack.c.b16 %v3030, %v3028
    %v3177 = vpack.c.b16 %v3033, %v3031
    %v3178 = vpack.c.b16 %v3034, %v3032
    %v3179 = vpack.c.b16 %v3037, %v3035
    %v3180 = vpack.c.b16 %v3038, %v3036
    %v3181 = vpack.c.b16 %v3041, %v3039
    %v3182 = vpack.c.b16 %v3042, %v3040
    %v3183 = vpack.c.b16 %v3045, %v3043
    %v3184 = vpack.c.b16 %v3046, %v3044
    %v3185 = vpack.c.b16 %v3049, %v3047
    %v3186 = vpack.c.b16 %v3050, %v3048
    %v3187 = vpack.c.b16 %v3053, %v3051
    %v3188 = vpack.c.b16 %v3054, %v3052
    %v3189 = vpack.c.b16 %v3057, %v3055
    %v3190 = vpack.c.b16 %v3058, %v3056
    %v3191 = vpack.c.b16 %v3061, %v3059
    %v3192 = vpack.c.b16 %v3062, %v3060
    %v3193 = vpack.c.b16 %v3065, %v3063
    %v3194 = vpack.c.b16 %v3066, %v3064
    %3323 = vmatprep.subr.bf16.mxu0 %v3068
    %3324 = vmatpush1.bf16.msra.mxu0 %v3067
    %3325 = vmatprep.subr.bf16.mxu0 %v3070
    %3326 = vmatpush1.bf16.msra.mxu0 %v3069
    %3327 = vmatprep.subr.bf16.mxu0 %v3072
    %3328 = vmatpush1.bf16.msra.mxu0 %v3071
    %3329 = vmatprep.subr.bf16.mxu0 %v3074
    %3330 = vmatpush1.bf16.msra.mxu0 %v3073
    %3331 = vmatprep.subr.bf16.mxu0 %v3076
    %3332 = vmatpush1.bf16.msra.mxu0 %v3075
    %3333 = vmatprep.subr.bf16.mxu0 %v3078
    %3334 = vmatpush1.bf16.msra.mxu0 %v3077
    %3335 = vmatprep.subr.bf16.mxu0 %v3080
    %3336 = vmatpush1.bf16.msra.mxu0 %v3079
    %3337 = vmatprep.subr.bf16.mxu0 %v3082
    %3338 = vmatpush1.bf16.msra.mxu0 %v3081
    %3339 = vmatprep.subr.bf16.mxu0 %v3084
    %3340 = vmatpush1.bf16.msra.mxu0 %v3083
    %3341 = vmatprep.subr.bf16.mxu0 %v3086
    %3342 = vmatpush1.bf16.msra.mxu0 %v3085
    %3343 = vmatprep.subr.bf16.mxu0 %v3088
    %3344 = vmatpush1.bf16.msra.mxu0 %v3087
    %3345 = vmatprep.subr.bf16.mxu0 %v3090
    %3346 = vmatpush1.bf16.msra.mxu0 %v3089
    %3347 = vmatprep.subr.bf16.mxu0 %v3092
    %3348 = vmatpush1.bf16.msra.mxu0 %v3091
    %3349 = vmatprep.subr.bf16.mxu0 %v3094
    %3350 = vmatpush1.bf16.msra.mxu0 %v3093
    %3351 = vmatprep.subr.bf16.mxu0 %v3096
    %3352 = vmatpush1.bf16.msra.mxu0 %v3095
    %3353 = vmatprep.subr.bf16.mxu0 %v3098
    %3354 = vmatpush1.bf16.msra.mxu0 %v3097
    %3355 = vmatprep.mubr.bf16.mxu0 %v2536
    %3356 = vmatmul.mubr.bf16.gmra.mrb[0].mxu0 %v2535
    %v3357 = vpop.f32.mrb[0].mxu0
    %v3358 = vadd.f32 %v2676, %v3357
    %v3359 = vpop.f32.mrb[0].mxu0
    %v3360 = vadd.f32 %v2680, %v3359
    %v3361 = vpop.f32.mrb[0].mxu0
    %v3362 = vadd.f32 %v2676, %v3361
    %v3363 = vpop.f32.mrb[0].mxu0
    %v3364 = vadd.f32 %v2680, %v3363
    %3365 = vdwg.mxu0
    %3366 = vmatprep.subr.bf16.mxu0 %v3100
    %3367 = vmatpush1.bf16.msra.mxu0 %v3099
    %3368 = vmatprep.subr.bf16.mxu0 %v3102
    %3369 = vmatpush1.bf16.msra.mxu0 %v3101
    %3370 = vmatprep.subr.bf16.mxu0 %v3104
    %3371 = vmatpush1.bf16.msra.mxu0 %v3103
    %3372 = vmatprep.subr.bf16.mxu0 %v3106
    %3373 = vmatpush1.bf16.msra.mxu0 %v3105
    %3374 = vmatprep.subr.bf16.mxu0 %v3108
    %3375 = vmatpush1.bf16.msra.mxu0 %v3107
    %3376 = vmatprep.subr.bf16.mxu0 %v3110
    %3377 = vmatpush1.bf16.msra.mxu0 %v3109
    %3378 = vmatprep.subr.bf16.mxu0 %v3112
    %3379 = vmatpush1.bf16.msra.mxu0 %v3111
    %3380 = vmatprep.subr.bf16.mxu0 %v3114
    %3381 = vmatpush1.bf16.msra.mxu0 %v3113
    %3382 = vmatprep.subr.bf16.mxu0 %v3116
    %3383 = vmatpush1.bf16.msra.mxu0 %v3115
    %3384 = vmatprep.subr.bf16.mxu0 %v3118
    %3385 = vmatpush1.bf16.msra.mxu0 %v3117
    %3386 = vmatprep.subr.bf16.mxu0 %v3120
    %3387 = vmatpush1.bf16.msra.mxu0 %v3119
    %3388 = vmatprep.subr.bf16.mxu0 %v3122
    %3389 = vmatpush1.bf16.msra.mxu0 %v3121
    %3390 = vmatprep.subr.bf16.mxu0 %v3124
    %3391 = vmatpush1.bf16.msra.mxu0 %v3123
    %3392 = vmatprep.subr.bf16.mxu0 %v3126
    %3393 = vmatpush1.bf16.msra.mxu0 %v3125
    %3394 = vmatprep.subr.bf16.mxu0 %v3128
    %3395 = vmatpush1.bf16.msra.mxu0 %v3127
    %3396 = vmatprep.subr.bf16.mxu0 %v3130
    %3397 = vmatpush1.bf16.msra.mxu0 %v3129
    %3398 = vmatprep.mubr.bf16.mxu0 %v2538
    %3399 = vmatmul.mubr.bf16.gmra.mrb[0].mxu0 %v2537
    %v3400 = vpop.f32.mrb[0].mxu0
    %v3401 = vadd.f32 %v3358, %v3400
    %v3402 = vpop.f32.mrb[0].mxu0
    %v3403 = vadd.f32 %v3360, %v3402
    %v3404 = vpop.f32.mrb[0].mxu0
    %v3405 = vadd.f32 %v3362, %v3404
    %v3406 = vpop.f32.mrb[0].mxu0
    %v3407 = vadd.f32 %v3364, %v3406
    %3408 = vdwg.mxu0
    %3409 = vmatprep.subr.bf16.mxu0 %v3132
    %3410 = vmatpush1.bf16.msra.mxu0 %v3131
    %3411 = vmatprep.subr.bf16.mxu0 %v3134
    %3412 = vmatpush1.bf16.msra.mxu0 %v3133
    %3413 = vmatprep.subr.bf16.mxu0 %v3136
    %3414 = vmatpush1.bf16.msra.mxu0 %v3135
    %3415 = vmatprep.subr.bf16.mxu0 %v3138
    %3416 = vmatpush1.bf16.msra.mxu0 %v3137
    %3417 = vmatprep.subr.bf16.mxu0 %v3140
    %3418 = vmatpush1.bf16.msra.mxu0 %v3139
    %3419 = vmatprep.subr.bf16.mxu0 %v3142
    %3420 = vmatpush1.bf16.msra.mxu0 %v3141
    %3421 = vmatprep.subr.bf16.mxu0 %v3144
    %3422 = vmatpush1.bf16.msra.mxu0 %v3143
    %3423 = vmatprep.subr.bf16.mxu0 %v3146
    %3424 = vmatpush1.bf16.msra.mxu0 %v3145
    %3425 = vmatprep.subr.bf16.mxu0 %v3148
    %3426 = vmatpush1.bf16.msra.mxu0 %v3147
    %3427 = vmatprep.subr.bf16.mxu0 %v3150
    %3428 = vmatpush1.bf16.msra.mxu0 %v3149
    %3429 = vmatprep.subr.bf16.mxu0 %v3152
    %3430 = vmatpush1.bf16.msra.mxu0 %v3151
    %3431 = vmatprep.subr.bf16.mxu0 %v3154
    %3432 = vmatpush1.bf16.msra.mxu0 %v3153
    %3433 = vmatprep.subr.bf16.mxu0 %v3156
    %3434 = vmatpush1.bf16.msra.mxu0 %v3155
    %3435 = vmatprep.subr.bf16.mxu0 %v3158
    %3436 = vmatpush1.bf16.msra.mxu0 %v3157
    %3437 = vmatprep.subr.bf16.mxu0 %v3160
    %3438 = vmatpush1.bf16.msra.mxu0 %v3159
    %3439 = vmatprep.subr.bf16.mxu0 %v3162
    %3440 = vmatpush1.bf16.msra.mxu0 %v3161
    %3441 = vmatprep.mubr.bf16.mxu0 %v2540
    %3442 = vmatmul.mubr.bf16.gmra.mrb[0].mxu0 %v2539
    %v3443 = vpop.f32.mrb[0].mxu0
    %v3444 = vadd.f32 %v3401, %v3443
    %v3445 = vpop.f32.mrb[0].mxu0
    %v3446 = vadd.f32 %v3403, %v3445
    %v3447 = vpop.f32.mrb[0].mxu0
    %v3448 = vadd.f32 %v3405, %v3447
    %v3449 = vpop.f32.mrb[0].mxu0
    %v3450 = vadd.f32 %v3407, %v3449
    %3451 = vdwg.mxu0
    %3452 = vmatprep.subr.bf16.mxu0 %v3164
    %3453 = vmatpush1.bf16.msra.mxu0 %v3163
    %3454 = vmatprep.subr.bf16.mxu0 %v3166
    %3455 = vmatpush1.bf16.msra.mxu0 %v3165
    %3456 = vmatprep.subr.bf16.mxu0 %v3168
    %3457 = vmatpush1.bf16.msra.mxu0 %v3167
    %3458 = vmatprep.subr.bf16.mxu0 %v3170
    %3459 = vmatpush1.bf16.msra.mxu0 %v3169
    %3460 = vmatprep.subr.bf16.mxu0 %v3172
    %3461 = vmatpush1.bf16.msra.mxu0 %v3171
    %3462 = vmatprep.subr.bf16.mxu0 %v3174
    %3463 = vmatpush1.bf16.msra.mxu0 %v3173
    %3464 = vmatprep.subr.bf16.mxu0 %v3176
    %3465 = vmatpush1.bf16.msra.mxu0 %v3175
    %3466 = vmatprep.subr.bf16.mxu0 %v3178
    %3467 = vmatpush1.bf16.msra.mxu0 %v3177
    %3468 = vmatprep.subr.bf16.mxu0 %v3180
    %3469 = vmatpush1.bf16.msra.mxu0 %v3179
    %3470 = vmatprep.subr.bf16.mxu0 %v3182
    %3471 = vmatpush1.bf16.msra.mxu0 %v3181
    %3472 = vmatprep.subr.bf16.mxu0 %v3184
    %3473 = vmatpush1.bf16.msra.mxu0 %v3183
    %3474 = vmatprep.subr.bf16.mxu0 %v3186
    %3475 = vmatpush1.bf16.msra.mxu0 %v3185
    %3476 = vmatprep.subr.bf16.mxu0 %v3188
    %3477 = vmatpush1.bf16.msra.mxu0 %v3187
    %3478 = vmatprep.subr.bf16.mxu0 %v3190
    %3479 = vmatpush1.bf16.msra.mxu0 %v3189
    %3480 = vmatprep.subr.bf16.mxu0 %v3192
    %3481 = vmatpush1.bf16.msra.mxu0 %v3191
    %3482 = vmatprep.subr.bf16.mxu0 %v3194
    %3483 = vmatpush1.bf16.msra.mxu0 %v3193
    %3484 = vmatprep.mubr.bf16.mxu0 %v2542
    %3485 = vmatmul.mubr.bf16.gmra.mrb[0].mxu0 %v2541
    %v3486 = vpop.f32.mrb[0].mxu0
    %v3487 = vadd.f32 %v3444, %v3486
    %v3488 = vpop.f32.mrb[0].mxu0
    %v3489 = vadd.f32 %v3446, %v3488
    %v3490 = vpop.f32.mrb[0].mxu0
    %v3491 = vadd.f32 %v3448, %v3490
    %v3492 = vpop.f32.mrb[0].mxu0
    %v3493 = vadd.f32 %v3450, %v3492
    %3494 = vdwg.mxu0
    %v3495 = vmax.f32 %v3487, 0.0
    %v3496 = vmax.f32 %v3489, 0.0
    %v3497 = vmax.f32 %v3491, 0.0
    %v3498 = vmax.f32 %v3493, 0.0
    %v3499 = vpack.c.bf16 %v3497, %v3495
    %v3500 = vpack.c.bf16 %v3498, %v3496
    %v3501 = vld [vmem:[#allocation11] sm:$0xf]
    %v3502 = vld [vmem:[#allocation11 + $0x4] sm:$0xf]
    %v3503 = vld [vmem:[#allocation11 + $0x8] sm:$0xf]
    %v3504 = vld [vmem:[#allocation11 + $0xc] sm:$0xf]
    %v3505 = vld [vmem:[#allocation11 + $0x10] sm:$0xf]
    %v3506 = vld [vmem:[#allocation11 + $0x14] sm:$0xf]
    %v3507 = vld [vmem:[#allocation11 + $0x18] sm:$0xf]
    %v3508 = vld [vmem:[#allocation11 + $0x1c] sm:$0xf]
    %v3509 = vld [vmem:[#allocation11 + $0x20] sm:$0xf]
    %v3510 = vld [vmem:[#allocation11 + $0x24] sm:$0xf]
    %v3511 = vld [vmem:[#allocation11 + $0x28] sm:$0xf]
    %v3512 = vld [vmem:[#allocation11 + $0x2c] sm:$0xf]
    %v3513 = vld [vmem:[#allocation11 + $0x30] sm:$0xf]
    %v3514 = vld [vmem:[#allocation11 + $0x34] sm:$0xf]
    %v3515 = vld [vmem:[#allocation11 + $0x38] sm:$0xf]
    %v3516 = vld [vmem:[#allocation11 + $0x3c] sm:$0xf]
    %v3517 = vld [vmem:[#allocation11 + $0x40] sm:$0xf]
    %v3518 = vld [vmem:[#allocation11 + $0x44] sm:$0xf]
    %v3519 = vld [vmem:[#allocation11 + $0x48] sm:$0xf]
    %v3520 = vld [vmem:[#allocation11 + $0x4c] sm:$0xf]
    %v3521 = vld [vmem:[#allocation11 + $0x50] sm:$0xf]
    %v3522 = vld [vmem:[#allocation11 + $0x54] sm:$0xf]
    %v3523 = vld [vmem:[#allocation11 + $0x58] sm:$0xf]
    %v3524 = vld [vmem:[#allocation11 + $0x5c] sm:$0xf]
    %v3525 = vld [vmem:[#allocation11 + $0x60] sm:$0xf]
    %v3526 = vld [vmem:[#allocation11 + $0x64] sm:$0xf]
    %v3527 = vld [vmem:[#allocation11 + $0x68] sm:$0xf]
    %v3528 = vld [vmem:[#allocation11 + $0x6c] sm:$0xf]
    %v3529 = vld [vmem:[#allocation11 + $0x70] sm:$0xf]
    %v3530 = vld [vmem:[#allocation11 + $0x74] sm:$0xf]
    %v3531 = vld [vmem:[#allocation11 + $0x78] sm:$0xf]
    %v3532 = vld [vmem:[#allocation11 + $0x7c] sm:$0xf]
    %v3533 = vld [vmem:[#allocation13] sm:$0x1]
    %v3535 = vlaneseq
    %v3536 = vshrl.u32 %v3535, 7
    %v3537 = vsub.s32 0, %v3536
    %v3538 = vrot.slane %v3533, %v3537
    %v3572 = vunpack.c.l.b16 %v3501
    %v3573 = vunpack.c.l.b16 %v3502
    %v3574 = vunpack.c.l.b16 %v3503
    %v3575 = vunpack.c.l.b16 %v3504
    %v3576 = vunpack.c.l.b16 %v3505
    %v3577 = vunpack.c.l.b16 %v3506
    %v3578 = vunpack.c.l.b16 %v3507
    %v3579 = vunpack.c.l.b16 %v3508
    %v3580 = vunpack.c.l.b16 %v3509
    %v3581 = vunpack.c.l.b16 %v3510
    %v3582 = vunpack.c.l.b16 %v3511
    %v3583 = vunpack.c.l.b16 %v3512
    %v3584 = vunpack.c.l.b16 %v3513
    %v3585 = vunpack.c.l.b16 %v3514
    %v3586 = vunpack.c.l.b16 %v3515
    %v3587 = vunpack.c.l.b16 %v3516
    %v3588 = vunpack.c.l.b16 %v3517
    %v3589 = vunpack.c.l.b16 %v3518
    %v3590 = vunpack.c.l.b16 %v3519
    %v3591 = vunpack.c.l.b16 %v3520
    %v3592 = vunpack.c.l.b16 %v3521
    %v3593 = vunpack.c.l.b16 %v3522
    %v3594 = vunpack.c.l.b16 %v3523
    %v3595 = vunpack.c.l.b16 %v3524
    %v3596 = vunpack.c.l.b16 %v3525
    %v3597 = vunpack.c.l.b16 %v3526
    %v3598 = vunpack.c.l.b16 %v3527
    %v3599 = vunpack.c.l.b16 %v3528
    %v3600 = vunpack.c.l.b16 %v3529
    %v3601 = vunpack.c.l.b16 %v3530
    %v3602 = vunpack.c.l.b16 %v3531
    %v3603 = vunpack.c.l.b16 %v3532
    %v3604 = vpack.c.b16 %v3573, %v3572
    %v3605 = vpack.c.b16 %v3575, %v3574
    %v3606 = vpack.c.b16 %v3577, %v3576
    %v3607 = vpack.c.b16 %v3579, %v3578
    %v3608 = vpack.c.b16 %v3581, %v3580
    %v3609 = vpack.c.b16 %v3583, %v3582
    %v3610 = vpack.c.b16 %v3585, %v3584
    %v3611 = vpack.c.b16 %v3587, %v3586
    %v3612 = vpack.c.b16 %v3589, %v3588
    %v3613 = vpack.c.b16 %v3591, %v3590
    %v3614 = vpack.c.b16 %v3593, %v3592
    %v3615 = vpack.c.b16 %v3595, %v3594
    %v3616 = vpack.c.b16 %v3597, %v3596
    %v3617 = vpack.c.b16 %v3599, %v3598
    %v3618 = vpack.c.b16 %v3601, %v3600
    %v3619 = vpack.c.b16 %v3603, %v3602
    %3636 = vmatprep.subr.bf16.mxu0 0
    %3637 = vmatpush1.bf16.msra.mxu0 %v3604
    %3638 = vmatprep.subr.bf16.mxu0 0
    %3639 = vmatpush1.bf16.msra.mxu0 %v3605
    %3640 = vmatprep.subr.bf16.mxu0 0
    %3641 = vmatpush1.bf16.msra.mxu0 %v3606
    %3642 = vmatprep.subr.bf16.mxu0 0
    %3643 = vmatpush1.bf16.msra.mxu0 %v3607
    %3644 = vmatprep.subr.bf16.mxu0 0
    %3645 = vmatpush1.bf16.msra.mxu0 %v3608
    %3646 = vmatprep.subr.bf16.mxu0 0
    %3647 = vmatpush1.bf16.msra.mxu0 %v3609
    %3648 = vmatprep.subr.bf16.mxu0 0
    %3649 = vmatpush1.bf16.msra.mxu0 %v3610
    %3650 = vmatprep.subr.bf16.mxu0 0
    %3651 = vmatpush1.bf16.msra.mxu0 %v3611
    %3652 = vmatprep.subr.bf16.mxu0 0
    %3653 = vmatpush1.bf16.msra.mxu0 %v3612
    %3654 = vmatprep.subr.bf16.mxu0 0
    %3655 = vmatpush1.bf16.msra.mxu0 %v3613
    %3656 = vmatprep.subr.bf16.mxu0 0
    %3657 = vmatpush1.bf16.msra.mxu0 %v3614
    %3658 = vmatprep.subr.bf16.mxu0 0
    %3659 = vmatpush1.bf16.msra.mxu0 %v3615
    %3660 = vmatprep.subr.bf16.mxu0 0
    %3661 = vmatpush1.bf16.msra.mxu0 %v3616
    %3662 = vmatprep.subr.bf16.mxu0 0
    %3663 = vmatpush1.bf16.msra.mxu0 %v3617
    %3664 = vmatprep.subr.bf16.mxu0 0
    %3665 = vmatpush1.bf16.msra.mxu0 %v3618
    %3666 = vmatprep.subr.bf16.mxu0 0
    %3667 = vmatpush1.bf16.msra.mxu0 %v3619
    %3668 = vmatprep.mubr.bf16.mxu0 %v3500
    %3669 = vmatmul.mubr.bf16.gmra.mrb[0].mxu0 %v3499
    %v3670 = vpop.f32.mrb[0].mxu0
    %v3671 = vadd.f32 %v3538, %v3670
    %v3672 = vpop.f32.mrb[0].mxu0
    %v3673 = vpop.f32.mrb[0].mxu0
    %v3674 = vadd.f32 %v3538, %v3673
    %v3675 = vpop.f32.mrb[0].mxu0
    %3676 = vdwg.mxu0
    %3677 = vst [vmem:[#allocation14] sm:$0xff] %v3671
    %3678 = vst [vmem:[#allocation14 + $0x8] sm:$0xff] %v3674
    // Predicated region
    $region58: #{tpu_custom_call.1} parent=1 // pred_check
      _
    $region59: #{tpu_custom_call.1} parent=1 // pred_check_branch
      %3680 = sbr.rel (0) target = $region61
    $region60: #{tpu_custom_call.1} parent=1 // pred_region
      %s3682 = ssub.s32 256, 256
      %3683 = vsyncadd [#allocation4], %s3682
      %s3684 = sshll.u32 [#allocation14], 4
      %s3685 = int_to_ptr.vmem [resolvable:$true] %s3684
      %3690 = dma.vmem_to_hbm [thread:$0]  %s3685, 256, %s7, [#allocation4], 128, 128, 8
    $region61: #{tpu_custom_call.1} parent=1 // pred_fallthru
      _
    // Predicated region
    $region62: #{tpu_custom_call.1} parent=1 // pred_check
      _
    $region63: #{tpu_custom_call.1} parent=1 // pred_check_branch
      %3692 = sbr.rel (0) target = $region65
    $region64: #{tpu_custom_call.1} parent=1 // pred_region
      %3693 = dma.done [#allocation4], 256
    $region65: #{tpu_custom_call.1} parent=1 // pred_fallthru
      _
    %3694 = vsyncpa [#allocation3], 1
    %3695 = vsyncpa [#allocation6], 1
    %3696 = vsyncpa [#allocation9], 1
    %3697 = vsyncpa [#allocation12], 1
    %3698 = vsyncpa [#allocation4], 1

</llo_original>
